<compile_context>
chip_gen: v6e
topology: v6e:2x2x1
jax: 0.10.0
libtpu: 0.0.40
codegen_flags: <defaults>
</compile_context>

<pallas_src>
import jax
import jax.numpy as jnp
from jax.experimental import pallas as pl
from jax.experimental.pallas import tpu as pltpu

_EPS = 1e-5      # PyTorch BatchNorm2d default eps
_LANE = 128      # TPU lane width


def _round_up(x, m):
    return ((x + m - 1) // m) * m


# ----------------------------- Pallas kernel --------------------------------
def _make_conv_kernel(taps, Ho, Wo, Cp_in, Cp_out, add_residual):
    """Fused conv (sum of kh*kw taps) + folded-BN bias + ReLU (+ residual).

    Block layout (one batch element per grid step):
      x_ref   : (1, Hp, Wp, Cp_in)   bf16  halo-padded activation
      w_ref   : (T, Cp_in, Cp_out)   bf16  BN-scale-folded weights, one per tap
      b_ref   : (1, Cp_out)          f32   folded BN bias
      res_ref : (1, Ho, Wo, Cp_out)  bf16  (only when add_residual)
      o_ref   : (1, Ho, Wo, Cp_out)
    """
    M = Ho * Wo

    def kernel(x_ref, w_ref, b_ref, *rest):
        if add_residual:
            res_ref, o_ref = rest
        else:
            (o_ref,) = rest

        acc = jnp.zeros((M, Cp_out), jnp.float32)
        if len(taps) == 1:
            # 1x1 conv: plain matmul, no spatial slicing needed.
            acc += jnp.dot(x_ref[...].reshape(M, Cp_in), w_ref[0],
                           preferred_element_type=jnp.float32)
        else:
            # Read the halo-padded activation once; unpack to f32 so the
            # (unaligned) spatial tap slices are plain 32-bit relayouts, then
            # re-pack each tap to bf16 for the MXU.
            xf = x_ref[...].astype(jnp.float32)
            for t, (di, dj) in enumerate(taps):
                tap = xf[0, di:di + Ho, dj:dj + Wo, :]
                acc += jnp.dot(tap.astype(jnp.bfloat16).reshape(M, Cp_in),
                               w_ref[t],
                               preferred_element_type=jnp.float32)

        y = jnp.maximum(acc + b_ref[...], 0.0)           # folded BN bias + ReLU
        if add_residual:
            y = y + res_ref[...].reshape(M, Cp_out).astype(jnp.float32)
        o_ref[...] = y.reshape(1, Ho, Wo, Cp_out).astype(o_ref.dtype)

    return kernel


# ------------------------------ op wrapper -----------------------------------
def _conv_bn_relu_op(a, p, residual=None, out_dtype=jnp.bfloat16):
    """One op of the block: Conv2d(bias=False,'same') -> BN(eval) -> ReLU.

    a        : (N, H, W, Cp_in) bf16, channel-padded NHWC activation.
    residual : optional (N, H, W, Cp_out) bf16, added after ReLU (block skip).
    Returns  : (N, Ho, Wo, Cp_out) in `out_dtype`.
    """
    N, H, W, Cp_in = a.shape
    c_out, c_in, k, _ = p["w"].shape
    stride = p["stride"]
    pad = (k - 1) // 2
    Cp_out = _round_up(c_out, _LANE)
    assert Cp_in == _round_up(c_in, _LANE)

    # Fold eval-mode BN: conv(x,w)*scale + bias  ==  conv(x, w*scale) + bias.
    scale = p["gamma"] / jnp.sqrt(p["var"] + _EPS)
    bias = p["beta"] - p["mean"] * scale
    w = p["w"] * scale[:, None, None, None]                        # OIHW, f32
    w = jnp.transpose(w, (2, 3, 1, 0)).reshape(k * k, c_in, c_out)  # tap-major
    w = jnp.pad(w, ((0, 0), (0, Cp_in - c_in), (0, Cp_out - c_out)))
    w = w.astype(jnp.bfloat16)
    bias = jnp.pad(bias, (0, Cp_out - c_out)).reshape(1, Cp_out).astype(jnp.float32)

    # Spatial halo pad only (no 9x im2col materialisation).
    xp = jnp.pad(a, ((0, 0), (pad, pad), (pad, pad), (0, 0))) if pad else a
    Hp, Wp = H + 2 * pad, W + 2 * pad
    Ho, Wo = H, W        # stride-1 conv; stride handled by subsampling below

    taps = [(di, dj) for di in range(k) for dj in range(k)]
    add_res = residual is not None

    in_specs = [
        pl.BlockSpec((1, Hp, Wp, Cp_in), lambda n: (n, 0, 0, 0)),
        pl.BlockSpec((k * k, Cp_in, Cp_out), lambda n: (0, 0, 0)),
        pl.BlockSpec((1, Cp_out), lambda n: (0, 0)),
    ]
    args = [xp, w, bias]
    if add_res:
        in_specs.append(pl.BlockSpec((1, Ho, Wo, Cp_out), lambda n: (n, 0, 0, 0)))
        args.append(residual)

    # TODO(synk): for very large feature maps the whole-image block should be
    # spatially tiled (with a 1-row halo) instead of one image per grid step.
    out = pl.pallas_call(
        _make_conv_kernel(taps, Ho, Wo, Cp_in, Cp_out, add_res),
        out_shape=jax.ShapeDtypeStruct((N, Ho, Wo, Cp_out), out_dtype),
        grid_spec=pltpu.PrefetchScalarGridSpec(
            num_scalar_prefetch=0,
            grid=(N,),                      # length >= 2 => both v7x TCs used
            in_specs=in_specs,
            out_specs=pl.BlockSpec((1, Ho, Wo, Cp_out), lambda n: (n, 0, 0, 0)),
        ),
        compiler_params=pltpu.CompilerParams(
            dimension_semantics=("parallel",),
            vmem_limit_bytes=32 * 1024 * 1024),
    )(*args)

    if stride > 1:
        # conv/BN/ReLU all commute with spatial subsampling.
        # TODO(synk): compute the strided output directly in-kernel instead of
        # subsampling the stride-1 result (wastes ~stride^2 compute).
        out = out[:, ::stride, ::stride, :]
    return out


# --------------------------- SinglePathBlock ---------------------------------
class SinglePathBlockPallas:
    """Pallas port of SinglePathBlock (conv-type two-path ops).

    Each op is Conv2d(bias=False, 'same' padding) -> BatchNorm2d (eval mode)
    -> ReLU; the kernel size comes from the op name ('conv3x3' / 'conv1x1').
    """
    # TODO(synk): non-conv two-path ops (e.g. pooling) are not implemented.

    def __init__(self, op_names, op_types, C_in, C_out, b_stride=1, key=None):
        self.op_names, self.op_types = op_names, op_types
        self.C_in, self.C_out, self.b_stride = C_in, C_out, b_stride
        self.params = []
        key = key if key is not None else jax.random.PRNGKey(0)
        C_curr = C_in
        is_first_conv = True
        for op_name, op_type in zip(op_names, op_types):
            if op_type == "conv" and is_first_conv:
                stride, c_in, c_out = b_stride, C_curr, C_out
                C_curr = C_out
                is_first_conv = False
            else:
                stride, c_in, c_out = 1, C_curr, C_curr
            k = 3 if "3x3" in op_name else 1
            key, k1, k2, k3, k4, k5 = jax.random.split(key, 6)
            self.params.append(dict(
                w=jax.random.normal(k1, (c_out, c_in, k, k), jnp.float32) * 0.1,
                gamma=jax.random.uniform(k2, (c_out,), jnp.float32, 0.5, 1.5),
                beta=jax.random.normal(k3, (c_out,), jnp.float32) * 0.1,
                mean=jax.random.normal(k4, (c_out,), jnp.float32) * 0.1,
                var=jax.random.uniform(k5, (c_out,), jnp.float32, 0.5, 1.5),
                stride=stride,
            ))

    def __len__(self):
        return len(self.params)

    @property
    def channel_size(self):
        return self.C_out

    def __call__(self, x_nchw):
        N, C, H, W = x_nchw.shape
        Cp = _round_up(C, _LANE)

        # NCHW -> NHWC once at block entry; channel-pad to lane width; bf16.
        a = jnp.transpose(x_nchw, (0, 2, 3, 1))
        a = jnp.pad(a, ((0, 0), (0, 0), (0, 0), (0, Cp - C))).astype(jnp.bfloat16)

        res_possible = (self.b_stride == 1 and self.C_in == self.C_out)
        res = a if res_possible else None

        n_ops = len(self.params)
        for idx, p in enumerate(self.params):
            is_last = idx == n_ops - 1
            residual = res if (res_possible and is_last) else None
            out_dtype = jnp.float32 if is_last else jnp.bfloat16
            a = _conv_bn_relu_op(a, p, residual=residual, out_dtype=out_dtype)

        c_last = self.params[-1]["w"].shape[0] if self.params else C
        out = a[..., :c_last].astype(jnp.float32)
        return jnp.transpose(out, (0, 3, 1, 2))           # back to NCHW


# ----------------------------- Reference check -------------------------------
def _ref_forward(block, x):
    # Mirrors the kernel's precision: bf16 matmul inputs / bf16 intermediates,
    # f32 accumulation and epilogue.
    def as_bf16(v):
        return v.astype(jnp.bfloat16).astype(jnp.float32)

    out = as_bf16(x)
    res = out
    n_ops = len(block.params)
    for idx, p in enumerate(block.params):
        w = p["w"]
        k = w.shape[2]
        pad = (k - 1) // 2
        scale = p["gamma"] / jnp.sqrt(p["var"] + _EPS)
        bias = p["beta"] - p["mean"] * scale
        w_fold = as_bf16(w * scale[:, None, None, None])
        conv = jax.lax.conv_general_dilated(
            out, w_fold, window_strides=(p["stride"], p["stride"]),
            padding=[(pad, pad), (pad, pad)],
            dimension_numbers=("NCHW", "OIHW", "NCHW"))
        out = jnp.maximum(conv + bias[None, :, None, None], 0.0)
        if idx != n_ops - 1:
            out = as_bf16(out)
    if block.b_stride == 1 and block.C_in == block.C_out:
        out = out + res
    return out


if __name__ == "__main__":
    key = jax.random.PRNGKey(0)
    kx, kp = jax.random.split(key)

    N, C, H, W = 2, 4, 16, 16
    x = jax.random.normal(kx, (N, C, H, W), jnp.float32)

    block = SinglePathBlockPallas(
        op_names=["conv3x3", "conv1x1"],
        op_types=["conv", "conv"],
        C_in=C, C_out=C, b_stride=1, key=kp)

    y = jax.block_until_ready(block(x))
    y_ref = _ref_forward(block, x)

    assert y.shape == (N, C, H, W), y.shape
    err = float(jnp.max(jnp.abs(y - y_ref)))
    # bf16 matmul inputs + bf16 intermediate activations => allow ~1 bf16 ulp.
    assert err < 1e-2, err
    print("KERNEL_OK")
</pallas_src>

<mosaic_0001>
module attributes {stable_mosaic.version = 11 : i64} {
  func.func @kernel(%arg0: i32, %arg1: memref<1x18x18x128xbf16, #tpu.memory_space<vmem>>, %arg2: memref<9x128x128xbf16, #tpu.memory_space<vmem>>, %arg3: memref<1x128xf32, #tpu.memory_space<vmem>>, %arg4: memref<1x16x16x128xbf16, #tpu.memory_space<vmem>>) attributes {dimension_semantics = [#tpu.dimension_semantics<parallel>], iteration_bounds = array<i64: 2>, scalar_prefetch = 0 : i64, scratch_operands = 0 : i64, tpu.core_type = #tpu.core_type<tc>, window_params = [{transform_indices = @transform_0, window_bounds = array<i64: 1, 18, 18, 128>}, {pipeline_mode = #tpu.pipeline_mode<synchronous>, transform_indices = @transform_1, window_bounds = array<i64: 9, 128, 128>}, {pipeline_mode = #tpu.pipeline_mode<synchronous>, transform_indices = @transform_2, window_bounds = array<i64: 1, 128>}, {transform_indices = @transform_3, window_bounds = array<i64: 1, 16, 16, 128>}]} {
    %cst = arith.constant 0.000000e+00 : f32
    %0 = vector.broadcast %cst : f32 to vector<256x128xf32>
    %c0 = arith.constant 0 : index
    %c0_0 = arith.constant 0 : index
    %c0_1 = arith.constant 0 : index
    %c0_2 = arith.constant 0 : index
    %1 = vector.load %arg1[%c0, %c0_0, %c0_1, %c0_2] : memref<1x18x18x128xbf16, #tpu.memory_space<vmem>>, vector<1x18x18x128xbf16>
    %2 = arith.extf %1 : vector<1x18x18x128xbf16> to vector<1x18x18x128xf32>
    %3 = vector.extract_strided_slice %2 {offsets = [0, 0, 0, 0], sizes = [1, 16, 16, 128], strides = [1, 1, 1, 1]} : vector<1x18x18x128xf32> to vector<1x16x16x128xf32>
    %4 = vector.shape_cast %3 : vector<1x16x16x128xf32> to vector<16x16x128xf32>
    %5 = arith.truncf %4 : vector<16x16x128xf32> to vector<16x16x128xbf16>
    %6 = vector.shape_cast %5 : vector<16x16x128xbf16> to vector<256x128xbf16>
    %c0_3 = arith.constant 0 : index
    %c0_4 = arith.constant 0 : index
    %c0_5 = arith.constant 0 : index
    %7 = vector.load %arg2[%c0_3, %c0_4, %c0_5] : memref<9x128x128xbf16, #tpu.memory_space<vmem>>, vector<1x128x128xbf16>
    %8 = vector.shape_cast %7 : vector<1x128x128xbf16> to vector<128x128xbf16>
    %cst_6 = arith.constant dense<0.000000e+00> : vector<256x128xf32>
    %9 = tpu.matmul %6, %8, %cst_6 {dimension_numbers = #tpu.dot_dimension_numbers<[1], [0], [0], [1], [0, 0, 1, 1], [], []>} : vector<256x128xbf16>, vector<128x128xbf16>, vector<256x128xf32> -> vector<256x128xf32>
    %10 = arith.addf %0, %9 : vector<256x128xf32>
    %11 = vector.extract_strided_slice %2 {offsets = [0, 0, 1, 0], sizes = [1, 16, 16, 128], strides = [1, 1, 1, 1]} : vector<1x18x18x128xf32> to vector<1x16x16x128xf32>
    %12 = vector.shape_cast %11 : vector<1x16x16x128xf32> to vector<16x16x128xf32>
    %13 = arith.truncf %12 : vector<16x16x128xf32> to vector<16x16x128xbf16>
    %14 = vector.shape_cast %13 : vector<16x16x128xbf16> to vector<256x128xbf16>
    %c1 = arith.constant 1 : index
    %c0_7 = arith.constant 0 : index
    %c0_8 = arith.constant 0 : index
    %15 = vector.load %arg2[%c1, %c0_7, %c0_8] : memref<9x128x128xbf16, #tpu.memory_space<vmem>>, vector<1x128x128xbf16>
    %16 = vector.shape_cast %15 : vector<1x128x128xbf16> to vector<128x128xbf16>
    %cst_9 = arith.constant dense<0.000000e+00> : vector<256x128xf32>
    %17 = tpu.matmul %14, %16, %cst_9 {dimension_numbers = #tpu.dot_dimension_numbers<[1], [0], [0], [1], [0, 0, 1, 1], [], []>} : vector<256x128xbf16>, vector<128x128xbf16>, vector<256x128xf32> -> vector<256x128xf32>
    %18 = arith.addf %10, %17 : vector<256x128xf32>
    %19 = vector.extract_strided_slice %2 {offsets = [0, 0, 2, 0], sizes = [1, 16, 16, 128], strides = [1, 1, 1, 1]} : vector<1x18x18x128xf32> to vector<1x16x16x128xf32>
    %20 = vector.shape_cast %19 : vector<1x16x16x128xf32> to vector<16x16x128xf32>
    %21 = arith.truncf %20 : vector<16x16x128xf32> to vector<16x16x128xbf16>
    %22 = vector.shape_cast %21 : vector<16x16x128xbf16> to vector<256x128xbf16>
    %c2 = arith.constant 2 : index
    %c0_10 = arith.constant 0 : index
    %c0_11 = arith.constant 0 : index
    %23 = vector.load %arg2[%c2, %c0_10, %c0_11] : memref<9x128x128xbf16, #tpu.memory_space<vmem>>, vector<1x128x128xbf16>
    %24 = vector.shape_cast %23 : vector<1x128x128xbf16> to vector<128x128xbf16>
    %cst_12 = arith.constant dense<0.000000e+00> : vector<256x128xf32>
    %25 = tpu.matmul %22, %24, %cst_12 {dimension_numbers = #tpu.dot_dimension_numbers<[1], [0], [0], [1], [0, 0, 1, 1], [], []>} : vector<256x128xbf16>, vector<128x128xbf16>, vector<256x128xf32> -> vector<256x128xf32>
    %26 = arith.addf %18, %25 : vector<256x128xf32>
    %27 = vector.extract_strided_slice %2 {offsets = [0, 1, 0, 0], sizes = [1, 16, 16, 128], strides = [1, 1, 1, 1]} : vector<1x18x18x128xf32> to vector<1x16x16x128xf32>
    %28 = vector.shape_cast %27 : vector<1x16x16x128xf32> to vector<16x16x128xf32>
    %29 = arith.truncf %28 : vector<16x16x128xf32> to vector<16x16x128xbf16>
    %30 = vector.shape_cast %29 : vector<16x16x128xbf16> to vector<256x128xbf16>
    %c3 = arith.constant 3 : index
    %c0_13 = arith.constant 0 : index
    %c0_14 = arith.constant 0 : index
    %31 = vector.load %arg2[%c3, %c0_13, %c0_14] : memref<9x128x128xbf16, #tpu.memory_space<vmem>>, vector<1x128x128xbf16>
    %32 = vector.shape_cast %31 : vector<1x128x128xbf16> to vector<128x128xbf16>
    %cst_15 = arith.constant dense<0.000000e+00> : vector<256x128xf32>
    %33 = tpu.matmul %30, %32, %cst_15 {dimension_numbers = #tpu.dot_dimension_numbers<[1], [0], [0], [1], [0, 0, 1, 1], [], []>} : vector<256x128xbf16>, vector<128x128xbf16>, vector<256x128xf32> -> vector<256x128xf32>
    %34 = arith.addf %26, %33 : vector<256x128xf32>
    %35 = vector.extract_strided_slice %2 {offsets = [0, 1, 1, 0], sizes = [1, 16, 16, 128], strides = [1, 1, 1, 1]} : vector<1x18x18x128xf32> to vector<1x16x16x128xf32>
    %36 = vector.shape_cast %35 : vector<1x16x16x128xf32> to vector<16x16x128xf32>
    %37 = arith.truncf %36 : vector<16x16x128xf32> to vector<16x16x128xbf16>
    %38 = vector.shape_cast %37 : vector<16x16x128xbf16> to vector<256x128xbf16>
    %c4 = arith.constant 4 : index
    %c0_16 = arith.constant 0 : index
    %c0_17 = arith.constant 0 : index
    %39 = vector.load %arg2[%c4, %c0_16, %c0_17] : memref<9x128x128xbf16, #tpu.memory_space<vmem>>, vector<1x128x128xbf16>
    %40 = vector.shape_cast %39 : vector<1x128x128xbf16> to vector<128x128xbf16>
    %cst_18 = arith.constant dense<0.000000e+00> : vector<256x128xf32>
    %41 = tpu.matmul %38, %40, %cst_18 {dimension_numbers = #tpu.dot_dimension_numbers<[1], [0], [0], [1], [0, 0, 1, 1], [], []>} : vector<256x128xbf16>, vector<128x128xbf16>, vector<256x128xf32> -> vector<256x128xf32>
    %42 = arith.addf %34, %41 : vector<256x128xf32>
    %43 = vector.extract_strided_slice %2 {offsets = [0, 1, 2, 0], sizes = [1, 16, 16, 128], strides = [1, 1, 1, 1]} : vector<1x18x18x128xf32> to vector<1x16x16x128xf32>
    %44 = vector.shape_cast %43 : vector<1x16x16x128xf32> to vector<16x16x128xf32>
    %45 = arith.truncf %44 : vector<16x16x128xf32> to vector<16x16x128xbf16>
    %46 = vector.shape_cast %45 : vector<16x16x128xbf16> to vector<256x128xbf16>
    %c5 = arith.constant 5 : index
    %c0_19 = arith.constant 0 : index
    %c0_20 = arith.constant 0 : index
    %47 = vector.load %arg2[%c5, %c0_19, %c0_20] : memref<9x128x128xbf16, #tpu.memory_space<vmem>>, vector<1x128x128xbf16>
    %48 = vector.shape_cast %47 : vector<1x128x128xbf16> to vector<128x128xbf16>
    %cst_21 = arith.constant dense<0.000000e+00> : vector<256x128xf32>
    %49 = tpu.matmul %46, %48, %cst_21 {dimension_numbers = #tpu.dot_dimension_numbers<[1], [0], [0], [1], [0, 0, 1, 1], [], []>} : vector<256x128xbf16>, vector<128x128xbf16>, vector<256x128xf32> -> vector<256x128xf32>
    %50 = arith.addf %42, %49 : vector<256x128xf32>
    %51 = vector.extract_strided_slice %2 {offsets = [0, 2, 0, 0], sizes = [1, 16, 16, 128], strides = [1, 1, 1, 1]} : vector<1x18x18x128xf32> to vector<1x16x16x128xf32>
    %52 = vector.shape_cast %51 : vector<1x16x16x128xf32> to vector<16x16x128xf32>
    %53 = arith.truncf %52 : vector<16x16x128xf32> to vector<16x16x128xbf16>
    %54 = vector.shape_cast %53 : vector<16x16x128xbf16> to vector<256x128xbf16>
    %c6 = arith.constant 6 : index
    %c0_22 = arith.constant 0 : index
    %c0_23 = arith.constant 0 : index
    %55 = vector.load %arg2[%c6, %c0_22, %c0_23] : memref<9x128x128xbf16, #tpu.memory_space<vmem>>, vector<1x128x128xbf16>
    %56 = vector.shape_cast %55 : vector<1x128x128xbf16> to vector<128x128xbf16>
    %cst_24 = arith.constant dense<0.000000e+00> : vector<256x128xf32>
    %57 = tpu.matmul %54, %56, %cst_24 {dimension_numbers = #tpu.dot_dimension_numbers<[1], [0], [0], [1], [0, 0, 1, 1], [], []>} : vector<256x128xbf16>, vector<128x128xbf16>, vector<256x128xf32> -> vector<256x128xf32>
    %58 = arith.addf %50, %57 : vector<256x128xf32>
    %59 = vector.extract_strided_slice %2 {offsets = [0, 2, 1, 0], sizes = [1, 16, 16, 128], strides = [1, 1, 1, 1]} : vector<1x18x18x128xf32> to vector<1x16x16x128xf32>
    %60 = vector.shape_cast %59 : vector<1x16x16x128xf32> to vector<16x16x128xf32>
    %61 = arith.truncf %60 : vector<16x16x128xf32> to vector<16x16x128xbf16>
    %62 = vector.shape_cast %61 : vector<16x16x128xbf16> to vector<256x128xbf16>
    %c7 = arith.constant 7 : index
    %c0_25 = arith.constant 0 : index
    %c0_26 = arith.constant 0 : index
    %63 = vector.load %arg2[%c7, %c0_25, %c0_26] : memref<9x128x128xbf16, #tpu.memory_space<vmem>>, vector<1x128x128xbf16>
    %64 = vector.shape_cast %63 : vector<1x128x128xbf16> to vector<128x128xbf16>
    %cst_27 = arith.constant dense<0.000000e+00> : vector<256x128xf32>
    %65 = tpu.matmul %62, %64, %cst_27 {dimension_numbers = #tpu.dot_dimension_numbers<[1], [0], [0], [1], [0, 0, 1, 1], [], []>} : vector<256x128xbf16>, vector<128x128xbf16>, vector<256x128xf32> -> vector<256x128xf32>
    %66 = arith.addf %58, %65 : vector<256x128xf32>
    %67 = vector.extract_strided_slice %2 {offsets = [0, 2, 2, 0], sizes = [1, 16, 16, 128], strides = [1, 1, 1, 1]} : vector<1x18x18x128xf32> to vector<1x16x16x128xf32>
    %68 = vector.shape_cast %67 : vector<1x16x16x128xf32> to vector<16x16x128xf32>
    %69 = arith.truncf %68 : vector<16x16x128xf32> to vector<16x16x128xbf16>
    %70 = vector.shape_cast %69 : vector<16x16x128xbf16> to vector<256x128xbf16>
    %c8 = arith.constant 8 : index
    %c0_28 = arith.constant 0 : index
    %c0_29 = arith.constant 0 : index
    %71 = vector.load %arg2[%c8, %c0_28, %c0_29] : memref<9x128x128xbf16, #tpu.memory_space<vmem>>, vector<1x128x128xbf16>
    %72 = vector.shape_cast %71 : vector<1x128x128xbf16> to vector<128x128xbf16>
    %cst_30 = arith.constant dense<0.000000e+00> : vector<256x128xf32>
    %73 = tpu.matmul %70, %72, %cst_30 {dimension_numbers = #tpu.dot_dimension_numbers<[1], [0], [0], [1], [0, 0, 1, 1], [], []>} : vector<256x128xbf16>, vector<128x128xbf16>, vector<256x128xf32> -> vector<256x128xf32>
    %74 = arith.addf %66, %73 : vector<256x128xf32>
    %c0_31 = arith.constant 0 : index
    %c0_32 = arith.constant 0 : index
    %75 = vector.load %arg3[%c0_31, %c0_32] : memref<1x128xf32, #tpu.memory_space<vmem>>, vector<1x128xf32>
    %76 = vector.broadcast %75 : vector<1x128xf32> to vector<256x128xf32>
    %77 = arith.addf %74, %76 : vector<256x128xf32>
    %cst_33 = arith.constant 0.000000e+00 : f32
    %78 = vector.broadcast %cst_33 : f32 to vector<256x128xf32>
    %79 = arith.maximumf %77, %78 : vector<256x128xf32>
    %80 = vector.shape_cast %79 : vector<256x128xf32> to vector<1x16x16x128xf32>
    %81 = arith.truncf %80 : vector<1x16x16x128xf32> to vector<1x16x16x128xbf16>
    %c0_34 = arith.constant 0 : index
    %c0_35 = arith.constant 0 : index
    %c0_36 = arith.constant 0 : index
    %c0_37 = arith.constant 0 : index
    %82 = vector.load %arg4[%c0_34, %c0_35, %c0_36, %c0_37] : memref<1x16x16x128xbf16, #tpu.memory_space<vmem>>, vector<1x16x16x128xbf16>
    tpu.vector_store %arg4[%c0_34, %c0_35, %c0_36, %c0_37], %81 {strides = array<i32>} : memref<1x16x16x128xbf16, #tpu.memory_space<vmem>>, vector<1x16x16x128xbf16>,
    return
  }
  func.func @transform_0(%arg0: i32) -> (i32, i32, i32, i32) {
    %c0_i32 = arith.constant 0 : i32
    %c0_i32_0 = arith.constant 0 : i32
    %c0_i32_1 = arith.constant 0 : i32
    %c0_i32_2 = arith.constant 0 : i32
    return %arg0, %c0_i32, %c0_i32_0, %c0_i32_1 : i32, i32, i32, i32
  }
  func.func @transform_1(%arg0: i32) -> (i32, i32, i32) {
    %c0_i32 = arith.constant 0 : i32
    %c0_i32_0 = arith.constant 0 : i32
    %c0_i32_1 = arith.constant 0 : i32
    %c0_i32_2 = arith.constant 0 : i32
    return %c0_i32, %c0_i32_0, %c0_i32_1 : i32, i32, i32
  }
  func.func @transform_2(%arg0: i32) -> (i32, i32) {
    %c0_i32 = arith.constant 0 : i32
    %c0_i32_0 = arith.constant 0 : i32
    %c0_i32_1 = arith.constant 0 : i32
    return %c0_i32, %c0_i32_0 : i32, i32
  }
  func.func @transform_3(%arg0: i32) -> (i32, i32, i32, i32) {
    %c0_i32 = arith.constant 0 : i32
    %c0_i32_0 = arith.constant 0 : i32
    %c0_i32_1 = arith.constant 0 : i32
    %c0_i32_2 = arith.constant 0 : i32
    return %arg0, %c0_i32, %c0_i32_0, %c0_i32_1 : i32, i32, i32, i32
  }
}

</mosaic_0001>

<llo_original>
// kernel: tpu_custom_call.1
$region0: #{tpu_custom_call.1}
  #allocation0 [shape = 'u32[]', space=smem, size = 0x4, offset = 0x4, fixed_abs, tag = 'smem constant byte address 0x4 - core index']
  #allocation1 [shape = 'u32[144,128]{1,0:T(1,128)}', space=vmem, size = 0x12000, scoped, tag = 'internal scratch']
  %s0 = inlined_call_operand.vmem [shape: bf16[2,18,18,128], index: 0, kind: input, shape index: {}]
  %s1 = inlined_call_operand.vmem [shape: bf16[9,128,128], index: 1, kind: input, shape index: {}]
  %s2 = inlined_call_operand.vmem [shape: f32[1,128], index: 2, kind: input, shape index: {}]
  %s3 = inlined_call_operand.hbm [shape: bf16[2,16,16,128], index: 3, kind: output, shape index: {}]
  %s4 = sld [smem:[#allocation0]]
  $region45: #{tpu_custom_call.1} parent=0
    _
  %s6 = ssub.s32 1, %s4
  %s7 = scalar_select 0, %s6, %s4
  $region1: #{tpu_custom_call.1} parent=0
    #allocation2 [shape = 'u8[131072]{0}', space=vmem, size = 0x20000, scoped, tag = 'output window, operand 0']
    #allocation3 [shape = 's32[2]{0}', space=sflag, size = 0x8, scoped, tag = 'scoped memory for tpu_custom_call.1']
    %8 = vsyncpa [#allocation3], 0
    %s9 = scalar_lea.sflag [#allocation3], 1
    %10 = vsyncpa %s9, 0
    loop: start=0, step=1, limit=4
    $region2: #{tpu_custom_call.1} parent=1 // loop_pre_header
      _
    $region3: #{tpu_custom_call.1} parent=1 // loop_header
      %s12 = sphi 0, %s16
      %p13 = scmp.ge.s32.totalorder %s12, 4
      %s22 = sphi 0, %s24
      %s25 = sphi 0, %s22
      %s26 = sphi 0, %s25
      %s42 = sphi 0, %s26
      %s46 = sphi 0, %s46
      %s48 = sphi 0, %s46
      %s49 = sphi 0, %s48
      %s63 = sphi 0, %s49
      %s67 = sphi 0, %s67
      %s69 = sphi 0, %s67
      %s70 = sphi 0, %s69
      %s84 = sphi 0, %s70
      %s90 = sphi 0, %s92
      %s93 = sphi 0, %s90
      %s94 = sphi 0, %s93
      %s110 = sphi 0, %s94
    $region4: #{tpu_custom_call.1} parent=1 // loop_header_branch
      %15 = sbr.rel (%p13) target = $region8
    $region5: #{tpu_custom_call.1} parent=1 // loop_body
      %s17 = ssub.s32 %s12, 1
      %s18 = ssub.s32 %s12, 2
      %s19 = sadd.s32 %s12, 1
      %s20 = ssub.s32 %s12, %s19
      %p21 = scmp.eq.s32.totalorder %s20, 0
      %s23 = sadd.s32 %s22, 1
      %s24 = scalar_select %p21, %s22, %s23
      %p27 = pneg %p21
      %p28 = scmp.eq.s32.totalorder %s12, 1
      %p29 = por %p27, %p28
      %p30 = scmp.ne.s32.totalorder %s22, %s25
      %p31 = scmp.eq.s32.totalorder %s12, 0
      %p32 = por %p30, %p31
      %p33 = scmp.ne.s32.totalorder %s22, %s25
      %p34 = scmp.eq.s32.totalorder %s17, 1
      %p35 = por %p33, %p34
      %p36 = scmp.ne.s32.totalorder %s25, %s26
      %p37 = scmp.eq.s32.totalorder %s17, 0
      %p38 = por %p36, %p37
      %p39 = scmp.ne.s32.totalorder %s25, %s26
      %p40 = scmp.eq.s32.totalorder %s18, 1
      %p41 = por %p39, %p40
      %p43 = scmp.ne.s32.totalorder %s26, %s42
      %p44 = scmp.eq.s32.totalorder %s18, 0
      %p45 = por %p43, %p44
      %s47 = sadd.s32 %s46, 1
      %p50 = scmp.eq.s32.totalorder %s12, 1
      %p51 = scmp.ne.s32.totalorder %s46, %s48
      %p52 = scmp.eq.s32.totalorder %s12, 0
      %p53 = por %p51, %p52
      %p54 = scmp.ne.s32.totalorder %s46, %s48
      %p55 = scmp.eq.s32.totalorder %s17, 1
      %p56 = por %p54, %p55
      %p57 = scmp.ne.s32.totalorder %s48, %s49
      %p58 = scmp.eq.s32.totalorder %s17, 0
      %p59 = por %p57, %p58
      %p60 = scmp.ne.s32.totalorder %s48, %s49
      %p61 = scmp.eq.s32.totalorder %s18, 1
      %p62 = por %p60, %p61
      %p64 = scmp.ne.s32.totalorder %s49, %s63
      %p65 = scmp.eq.s32.totalorder %s18, 0
      %p66 = por %p64, %p65
      %s68 = sadd.s32 %s67, 1
      %p71 = scmp.eq.s32.totalorder %s12, 1
      %p72 = scmp.ne.s32.totalorder %s67, %s69
      %p73 = scmp.eq.s32.totalorder %s12, 0
      %p74 = por %p72, %p73
      %p75 = scmp.ne.s32.totalorder %s67, %s69
      %p76 = scmp.eq.s32.totalorder %s17, 1
      %p77 = por %p75, %p76
      %p78 = scmp.ne.s32.totalorder %s69, %s70
      %p79 = scmp.eq.s32.totalorder %s17, 0
      %p80 = por %p78, %p79
      %p81 = scmp.ne.s32.totalorder %s69, %s70
      %p82 = scmp.eq.s32.totalorder %s18, 1
      %p83 = por %p81, %p82
      %p85 = scmp.ne.s32.totalorder %s70, %s84
      %p86 = scmp.eq.s32.totalorder %s18, 0
      %p87 = por %p85, %p86
      %s88 = ssub.s32 %s12, %s19
      %p89 = scmp.eq.s32.totalorder %s88, 0
      %s91 = sadd.s32 %s90, 1
      %s92 = scalar_select %p89, %s90, %s91
      %p95 = pneg %p89
      %p96 = scmp.eq.s32.totalorder %s12, 1
      %p97 = por %p95, %p96
      %p98 = scmp.ne.s32.totalorder %s90, %s93
      %p99 = scmp.eq.s32.totalorder %s12, 0
      %p100 = por %p98, %p99
      %p101 = scmp.ne.s32.totalorder %s90, %s93
      %p102 = scmp.eq.s32.totalorder %s17, 1
      %p103 = por %p101, %p102
      %p104 = scmp.ne.s32.totalorder %s93, %s94
      %p105 = scmp.eq.s32.totalorder %s17, 0
      %p106 = por %p104, %p105
      %p107 = scmp.ne.s32.totalorder %s93, %s94
      %p108 = scmp.eq.s32.totalorder %s18, 1
      %p109 = por %p107, %p108
      %p111 = scmp.ne.s32.totalorder %s94, %s110
      %p112 = scmp.eq.s32.totalorder %s18, 0
      %p113 = por %p111, %p112
      %p114 = scmp.le.s32.totalorder 1, %s12
      %p115 = scmp.lt.s32.totalorder %s12, 3
      %p116 = pnand %p114, %p115
      %p117 = pneg %p116
      // Predicated region
      $region9: #{tpu_custom_call.1} parent=5 // pred_check
        _
      $region10: #{tpu_custom_call.1} parent=5 // pred_check_branch
        %119 = sbr.rel (%p116) target = $region12
      $region11: #{tpu_custom_call.1} parent=5 // pred_region
        %s120 = ssub.s32 %s12, 1
        // Predicated region
        $region13: #{tpu_custom_call.1} parent=11 // pred_check
          %p121 = pneg %p59
        $region14: #{tpu_custom_call.1} parent=11 // pred_check_branch
          %123 = sbr.rel (%p121) target = $region16
        $region15: #{tpu_custom_call.1} parent=11 // pred_region
          _
        $region16: #{tpu_custom_call.1} parent=11 // pred_fallthru
          _
        // Predicated region
        $region17: #{tpu_custom_call.1} parent=11 // pred_check
          %p124 = pneg %p80
        $region18: #{tpu_custom_call.1} parent=11 // pred_check_branch
          %126 = sbr.rel (%p124) target = $region20
        $region19: #{tpu_custom_call.1} parent=11 // pred_region
          _
        $region20: #{tpu_custom_call.1} parent=11 // pred_fallthru
          _
      $region12: #{tpu_custom_call.1} parent=5 // pred_fallthru
        _
      %p127 = scmp.lt.s32.totalorder %s12, 2
      // Predicated region
      $region21: #{tpu_custom_call.1} parent=5 // pred_check
        %p128 = pneg %p127
      $region22: #{tpu_custom_call.1} parent=5 // pred_check_branch
        %130 = sbr.rel (%p128) target = $region24
      $region23: #{tpu_custom_call.1} parent=5 // pred_region
        // Predicated region
        $region25: #{tpu_custom_call.1} parent=23 // pred_check
          %p131 = pneg %p32
        $region26: #{tpu_custom_call.1} parent=23 // pred_check_branch
          %133 = sbr.rel (%p131) target = $region28
        $region27: #{tpu_custom_call.1} parent=23 // pred_region
          %p134 = scmp.lt.s32.totalorder %s12, 1
          %s135 = scalar_select %p134, %s12, 1
          %s136 = smul.addr %s135, 54
          %s137 = smul.addr %s136, 4
          %s138 = scalar_lea.vmem %s0, %s137
        $region28: #{tpu_custom_call.1} parent=23 // pred_fallthru
          _
      $region24: #{tpu_custom_call.1} parent=5 // pred_fallthru
        _
      %p139 = scmp.le.s32.totalorder 1, %s12
      %p140 = scmp.lt.s32.totalorder %s12, 3
      %p141 = pnand %p139, %p140
      %p142 = pneg %p141
      // Predicated region
      $region29: #{tpu_custom_call.1} parent=5 // pred_check
        _
      $region30: #{tpu_custom_call.1} parent=5 // pred_check_branch
        %144 = sbr.rel (%p141) target = $region32
      $region31: #{tpu_custom_call.1} parent=5 // pred_region
        %s145 = ssub.s32 %s12, 1
        %p146 = scmp.lt.s32.totalorder %s17, 1
        %s147 = scalar_select %p146, %s17, 1
        %s148 = smul.addr %s147, 54
        %s149 = smul.addr %s148, 4
        %s150 = scalar_lea.vmem %s0, %s149
        %p151 = pneg %p38
        %p152 = pneg %p35
        %p153 = pneg %p59
        %p154 = pneg %p56
        %p155 = pneg %p80
        %p156 = pneg %p77
        %p157 = pneg %p106
        %p158 = pneg %p103
        %s159 = sand.u32 %s93, 1
        %s160 = scalar_lea.sflag [#allocation3], %s159
        %s161 = sand.u32 %s93, 1
        %s162 = smul.addr %s161, 128
        %s163 = scalar_lea.vmem [#allocation2], %s162
        %p164 = scmp.lt.s32.totalorder %s17, 1
        %s165 = scalar_select %p164, %s17, 1
        %s166 = smul.addr %s165, 54
        %s167 = smul.addr %s166, 4
        %s168 = scalar_lea.vmem %s0, %s167
        %v170 = vld [vmem:[%s168] sm:$0xf]
        %v171 = vld [vmem:[%s168 + $0x4] sm:$0xf]
        %v172 = vld [vmem:[%s168 + $0x8] sm:$0x1]
        %v173 = vld [vmem:[%s168 + $0xc] sm:$0xf]
        %v174 = vld [vmem:[%s168 + $0x10] sm:$0xf]
        %v175 = vld [vmem:[%s168 + $0x14] sm:$0x1]
        %v176 = vld [vmem:[%s168 + $0x18] sm:$0xf]
        %v177 = vld [vmem:[%s168 + $0x1c] sm:$0xf]
        %v178 = vld [vmem:[%s168 + $0x20] sm:$0x1]
        %v179 = vld [vmem:[%s168 + $0x24] sm:$0xf]
        %v180 = vld [vmem:[%s168 + $0x28] sm:$0xf]
        %v181 = vld [vmem:[%s168 + $0x2c] sm:$0x1]
        %v182 = vld [vmem:[%s168 + $0x30] sm:$0xf]
        %v183 = vld [vmem:[%s168 + $0x34] sm:$0xf]
        %v184 = vld [vmem:[%s168 + $0x38] sm:$0x1]
        %v185 = vld [vmem:[%s168 + $0x3c] sm:$0xf]
        %v186 = vld [vmem:[%s168 + $0x40] sm:$0xf]
        %v187 = vld [vmem:[%s168 + $0x44] sm:$0x1]
        %v188 = vld [vmem:[%s168 + $0x48] sm:$0xf]
        %v189 = vld [vmem:[%s168 + $0x4c] sm:$0xf]
        %v190 = vld [vmem:[%s168 + $0x50] sm:$0x1]
        %v191 = vld [vmem:[%s168 + $0x54] sm:$0xf]
        %v192 = vld [vmem:[%s168 + $0x58] sm:$0xf]
        %v193 = vld [vmem:[%s168 + $0x5c] sm:$0x1]
        %v194 = vld [vmem:[%s168 + $0x60] sm:$0xf]
        %v195 = vld [vmem:[%s168 + $0x64] sm:$0xf]
        %v196 = vld [vmem:[%s168 + $0x68] sm:$0x1]
        %v197 = vld [vmem:[%s168 + $0x6c] sm:$0xf]
        %v198 = vld [vmem:[%s168 + $0x70] sm:$0xf]
        %v199 = vld [vmem:[%s168 + $0x74] sm:$0x1]
        %v200 = vld [vmem:[%s168 + $0x78] sm:$0xf]
        %v201 = vld [vmem:[%s168 + $0x7c] sm:$0xf]
        %v202 = vld [vmem:[%s168 + $0x80] sm:$0x1]
        %v203 = vld [vmem:[%s168 + $0x84] sm:$0xf]
        %v204 = vld [vmem:[%s168 + $0x88] sm:$0xf]
        %v205 = vld [vmem:[%s168 + $0x8c] sm:$0x1]
        %v206 = vld [vmem:[%s168 + $0x90] sm:$0xf]
        %v207 = vld [vmem:[%s168 + $0x94] sm:$0xf]
        %v208 = vld [vmem:[%s168 + $0x98] sm:$0x1]
        %v209 = vld [vmem:[%s168 + $0x9c] sm:$0xf]
        %v210 = vld [vmem:[%s168 + $0xa0] sm:$0xf]
        %v211 = vld [vmem:[%s168 + $0xa4] sm:$0x1]
        %v212 = vld [vmem:[%s168 + $0xa8] sm:$0xf]
        %v213 = vld [vmem:[%s168 + $0xac] sm:$0xf]
        %v214 = vld [vmem:[%s168 + $0xb0] sm:$0x1]
        %v215 = vld [vmem:[%s168 + $0xb4] sm:$0xf]
        %v216 = vld [vmem:[%s168 + $0xb8] sm:$0xf]
        %v217 = vld [vmem:[%s168 + $0xbc] sm:$0x1]
        %v218 = vld [vmem:[%s168 + $0xc0] sm:$0xf]
        %v219 = vld [vmem:[%s168 + $0xc4] sm:$0xf]
        %v220 = vld [vmem:[%s168 + $0xc8] sm:$0x1]
        %v221 = vld [vmem:[%s168 + $0xcc] sm:$0xf]
        %v222 = vld [vmem:[%s168 + $0xd0] sm:$0xf]
        %v223 = vld [vmem:[%s168 + $0xd4] sm:$0x1]
        %v224 = vunpack.c.l.bf16 %v170
        %v225 = vunpack.c.l.bf16 %v171
        %v226 = vunpack.c.l.bf16 %v172
        %v227 = vunpack.c.l.bf16 %v173
        %v228 = vunpack.c.l.bf16 %v174
        %v229 = vunpack.c.l.bf16 %v175
        %v230 = vunpack.c.l.bf16 %v176
        %v231 = vunpack.c.l.bf16 %v177
        %v232 = vunpack.c.l.bf16 %v178
        %v233 = vunpack.c.l.bf16 %v179
        %v234 = vunpack.c.l.bf16 %v180
        %v235 = vunpack.c.l.bf16 %v181
        %v236 = vunpack.c.l.bf16 %v182
        %v237 = vunpack.c.l.bf16 %v183
        %v238 = vunpack.c.l.bf16 %v184
        %v239 = vunpack.c.l.bf16 %v185
        %v240 = vunpack.c.l.bf16 %v186
        %v241 = vunpack.c.l.bf16 %v187
        %v242 = vunpack.c.l.bf16 %v188
        %v243 = vunpack.c.l.bf16 %v189
        %v244 = vunpack.c.l.bf16 %v190
        %v245 = vunpack.c.l.bf16 %v191
        %v246 = vunpack.c.l.bf16 %v192
        %v247 = vunpack.c.l.bf16 %v193
        %v248 = vunpack.c.l.bf16 %v194
        %v249 = vunpack.c.l.bf16 %v195
        %v250 = vunpack.c.l.bf16 %v196
        %v251 = vunpack.c.l.bf16 %v197
        %v252 = vunpack.c.l.bf16 %v198
        %v253 = vunpack.c.l.bf16 %v199
        %v254 = vunpack.c.l.bf16 %v200
        %v255 = vunpack.c.l.bf16 %v201
        %v256 = vunpack.c.l.bf16 %v202
        %v257 = vunpack.c.l.bf16 %v203
        %v258 = vunpack.c.l.bf16 %v204
        %v259 = vunpack.c.l.bf16 %v205
        %v260 = vunpack.c.l.bf16 %v206
        %v261 = vunpack.c.l.bf16 %v207
        %v262 = vunpack.c.l.bf16 %v208
        %v263 = vunpack.c.l.bf16 %v209
        %v264 = vunpack.c.l.bf16 %v210
        %v265 = vunpack.c.l.bf16 %v211
        %v266 = vunpack.c.l.bf16 %v212
        %v267 = vunpack.c.l.bf16 %v213
        %v268 = vunpack.c.l.bf16 %v214
        %v269 = vunpack.c.l.bf16 %v215
        %v270 = vunpack.c.l.bf16 %v216
        %v271 = vunpack.c.l.bf16 %v217
        %v272 = vunpack.c.l.bf16 %v218
        %v273 = vunpack.c.l.bf16 %v219
        %v274 = vunpack.c.l.bf16 %v220
        %v275 = vunpack.c.l.bf16 %v221
        %v276 = vunpack.c.l.bf16 %v222
        %v277 = vunpack.c.l.bf16 %v223
        %v278 = vpack.c.bf16 %v225, %v224
        %v279 = vpack.c.bf16 %v228, %v227
        %v280 = vpack.c.bf16 %v231, %v230
        %v281 = vpack.c.bf16 %v234, %v233
        %v282 = vpack.c.bf16 %v237, %v236
        %v283 = vpack.c.bf16 %v240, %v239
        %v284 = vpack.c.bf16 %v243, %v242
        %v285 = vpack.c.bf16 %v246, %v245
        %v286 = vpack.c.bf16 %v249, %v248
        %v287 = vpack.c.bf16 %v252, %v251
        %v288 = vpack.c.bf16 %v255, %v254
        %v289 = vpack.c.bf16 %v258, %v257
        %v290 = vpack.c.bf16 %v261, %v260
        %v291 = vpack.c.bf16 %v264, %v263
        %v292 = vpack.c.bf16 %v267, %v266
        %v293 = vpack.c.bf16 %v270, %v269
        %v294 = vld [vmem:[%s1] sm:$0xf]
        %v295 = vld [vmem:[%s1 + $0x4] sm:$0xf]
        %v296 = vld [vmem:[%s1 + $0x8] sm:$0xf]
        %v297 = vld [vmem:[%s1 + $0xc] sm:$0xf]
        %v298 = vld [vmem:[%s1 + $0x10] sm:$0xf]
        %v299 = vld [vmem:[%s1 + $0x14] sm:$0xf]
        %v300 = vld [vmem:[%s1 + $0x18] sm:$0xf]
        %v301 = vld [vmem:[%s1 + $0x1c] sm:$0xf]
        %v302 = vld [vmem:[%s1 + $0x20] sm:$0xf]
        %v303 = vld [vmem:[%s1 + $0x24] sm:$0xf]
        %v304 = vld [vmem:[%s1 + $0x28] sm:$0xf]
        %v305 = vld [vmem:[%s1 + $0x2c] sm:$0xf]
        %v306 = vld [vmem:[%s1 + $0x30] sm:$0xf]
        %v307 = vld [vmem:[%s1 + $0x34] sm:$0xf]
        %v308 = vld [vmem:[%s1 + $0x38] sm:$0xf]
        %v309 = vld [vmem:[%s1 + $0x3c] sm:$0xf]
        %v310 = vpack.c.bf16 %v226, %v226
        %v311 = vpack.c.bf16 %v229, %v229
        %v312 = vpack.c.bf16 %v232, %v232
        %v313 = vpack.c.bf16 %v235, %v235
        %v314 = vpack.c.bf16 %v238, %v238
        %v315 = vpack.c.bf16 %v241, %v241
        %v316 = vpack.c.bf16 %v244, %v244
        %v317 = vpack.c.bf16 %v247, %v247
        %v318 = vpack.c.bf16 %v250, %v250
        %v319 = vpack.c.bf16 %v253, %v253
        %v320 = vpack.c.bf16 %v256, %v256
        %v321 = vpack.c.bf16 %v259, %v259
        %v322 = vpack.c.bf16 %v262, %v262
        %v323 = vpack.c.bf16 %v265, %v265
        %v324 = vpack.c.bf16 %v268, %v268
        %v325 = vpack.c.bf16 %v271, %v271
        %vm326 = vsmask.f32 7424
        %v328 = vshrl.u32 %v278, 16
        %v330 = vshll.u32 %v278, 16
        %v332 = vrot.slane %v330, 1
        %v333 = vor.u32 %v328, %v332
        %v335 = vshll.u32 %v310, 16
        %v337 = vrot.slane %v335, 1
        %v338 = vsel %vm326, %v333, %v337
        %v340 = vshrl.u32 %v279, 16
        %v342 = vshll.u32 %v279, 16
        %v344 = vrot.slane %v342, 1
        %v345 = vor.u32 %v340, %v344
        %v347 = vshll.u32 %v311, 16
        %v349 = vrot.slane %v347, 1
        %v350 = vsel %vm326, %v345, %v349
        %v352 = vshrl.u32 %v280, 16
        %v354 = vshll.u32 %v280, 16
        %v356 = vrot.slane %v354, 1
        %v357 = vor.u32 %v352, %v356
        %v359 = vshll.u32 %v312, 16
        %v361 = vrot.slane %v359, 1
        %v362 = vsel %vm326, %v357, %v361
        %v364 = vshrl.u32 %v281, 16
        %v366 = vshll.u32 %v281, 16
        %v368 = vrot.slane %v366, 1
        %v369 = vor.u32 %v364, %v368
        %v371 = vshll.u32 %v313, 16
        %v373 = vrot.slane %v371, 1
        %v374 = vsel %vm326, %v369, %v373
        %v376 = vshrl.u32 %v282, 16
        %v378 = vshll.u32 %v282, 16
        %v380 = vrot.slane %v378, 1
        %v381 = vor.u32 %v376, %v380
        %v383 = vshll.u32 %v314, 16
        %v385 = vrot.slane %v383, 1
        %v386 = vsel %vm326, %v381, %v385
        %v388 = vshrl.u32 %v283, 16
        %v390 = vshll.u32 %v283, 16
        %v392 = vrot.slane %v390, 1
        %v393 = vor.u32 %v388, %v392
        %v395 = vshll.u32 %v315, 16
        %v397 = vrot.slane %v395, 1
        %v398 = vsel %vm326, %v393, %v397
        %v400 = vshrl.u32 %v284, 16
        %v402 = vshll.u32 %v284, 16
        %v404 = vrot.slane %v402, 1
        %v405 = vor.u32 %v400, %v404
        %v407 = vshll.u32 %v316, 16
        %v409 = vrot.slane %v407, 1
        %v410 = vsel %vm326, %v405, %v409
        %v412 = vshrl.u32 %v285, 16
        %v414 = vshll.u32 %v285, 16
        %v416 = vrot.slane %v414, 1
        %v417 = vor.u32 %v412, %v416
        %v419 = vshll.u32 %v317, 16
        %v421 = vrot.slane %v419, 1
        %v422 = vsel %vm326, %v417, %v421
        %v424 = vshrl.u32 %v286, 16
        %v426 = vshll.u32 %v286, 16
        %v428 = vrot.slane %v426, 1
        %v429 = vor.u32 %v424, %v428
        %v431 = vshll.u32 %v318, 16
        %v433 = vrot.slane %v431, 1
        %v434 = vsel %vm326, %v429, %v433
        %v436 = vshrl.u32 %v287, 16
        %v438 = vshll.u32 %v287, 16
        %v440 = vrot.slane %v438, 1
        %v441 = vor.u32 %v436, %v440
        %v443 = vshll.u32 %v319, 16
        %v445 = vrot.slane %v443, 1
        %v446 = vsel %vm326, %v441, %v445
        %v448 = vshrl.u32 %v288, 16
        %v450 = vshll.u32 %v288, 16
        %v452 = vrot.slane %v450, 1
        %v453 = vor.u32 %v448, %v452
        %v455 = vshll.u32 %v320, 16
        %v457 = vrot.slane %v455, 1
        %v458 = vsel %vm326, %v453, %v457
        %v460 = vshrl.u32 %v289, 16
        %v462 = vshll.u32 %v289, 16
        %v464 = vrot.slane %v462, 1
        %v465 = vor.u32 %v460, %v464
        %v467 = vshll.u32 %v321, 16
        %v469 = vrot.slane %v467, 1
        %v470 = vsel %vm326, %v465, %v469
        %v472 = vshrl.u32 %v290, 16
        %v474 = vshll.u32 %v290, 16
        %v476 = vrot.slane %v474, 1
        %v477 = vor.u32 %v472, %v476
        %v479 = vshll.u32 %v322, 16
        %v481 = vrot.slane %v479, 1
        %v482 = vsel %vm326, %v477, %v481
        %v484 = vshrl.u32 %v291, 16
        %v486 = vshll.u32 %v291, 16
        %v488 = vrot.slane %v486, 1
        %v489 = vor.u32 %v484, %v488
        %v491 = vshll.u32 %v323, 16
        %v493 = vrot.slane %v491, 1
        %v494 = vsel %vm326, %v489, %v493
        %v496 = vshrl.u32 %v292, 16
        %v498 = vshll.u32 %v292, 16
        %v500 = vrot.slane %v498, 1
        %v501 = vor.u32 %v496, %v500
        %v503 = vshll.u32 %v324, 16
        %v505 = vrot.slane %v503, 1
        %v506 = vsel %vm326, %v501, %v505
        %v508 = vshrl.u32 %v293, 16
        %v510 = vshll.u32 %v293, 16
        %v512 = vrot.slane %v510, 1
        %v513 = vor.u32 %v508, %v512
        %v515 = vshll.u32 %v325, 16
        %v517 = vrot.slane %v515, 1
        %v518 = vsel %vm326, %v513, %v517
        %s535 = scalar_lea.vmem %s1, 64
        %v536 = vld [vmem:[%s535] sm:$0xf]
        %v537 = vld [vmem:[%s535 + $0x4] sm:$0xf]
        %v538 = vld [vmem:[%s535 + $0x8] sm:$0xf]
        %v539 = vld [vmem:[%s535 + $0xc] sm:$0xf]
        %v540 = vld [vmem:[%s535 + $0x10] sm:$0xf]
        %v541 = vld [vmem:[%s535 + $0x14] sm:$0xf]
        %v542 = vld [vmem:[%s535 + $0x18] sm:$0xf]
        %v543 = vld [vmem:[%s535 + $0x1c] sm:$0xf]
        %v544 = vld [vmem:[%s535 + $0x20] sm:$0xf]
        %v545 = vld [vmem:[%s535 + $0x24] sm:$0xf]
        %v546 = vld [vmem:[%s535 + $0x28] sm:$0xf]
        %v547 = vld [vmem:[%s535 + $0x2c] sm:$0xf]
        %v548 = vld [vmem:[%s535 + $0x30] sm:$0xf]
        %v549 = vld [vmem:[%s535 + $0x34] sm:$0xf]
        %v550 = vld [vmem:[%s535 + $0x38] sm:$0xf]
        %v551 = vld [vmem:[%s535 + $0x3c] sm:$0xf]
        %v568 = vunpack.c.l.b16 %v536
        %v569 = vunpack.c.l.b16 %v537
        %v570 = vunpack.c.l.b16 %v538
        %v571 = vunpack.c.l.b16 %v539
        %v572 = vunpack.c.l.b16 %v540
        %v573 = vunpack.c.l.b16 %v541
        %v574 = vunpack.c.l.b16 %v542
        %v575 = vunpack.c.l.b16 %v543
        %v576 = vunpack.c.l.b16 %v544
        %v577 = vunpack.c.l.b16 %v545
        %v578 = vunpack.c.l.b16 %v546
        %v579 = vunpack.c.l.b16 %v547
        %v580 = vunpack.c.l.b16 %v548
        %v581 = vunpack.c.l.b16 %v549
        %v582 = vunpack.c.l.b16 %v550
        %v583 = vunpack.c.l.b16 %v551
        %v584 = vpack.c.b16 %v569, %v568
        %v585 = vpack.c.b16 %v571, %v570
        %v586 = vpack.c.b16 %v573, %v572
        %v587 = vpack.c.b16 %v575, %v574
        %v588 = vpack.c.b16 %v577, %v576
        %v589 = vpack.c.b16 %v579, %v578
        %v590 = vpack.c.b16 %v581, %v580
        %v591 = vpack.c.b16 %v583, %v582
        %600 = vmatprep.subr.bf16.mxu0 0
        %601 = vmatpush1.bf16.msra.mxu0 %v591
        %602 = vmatprep.subr.bf16.mxu0 0
        %603 = vmatpush1.bf16.msra.mxu0 %v590
        %604 = vmatprep.subr.bf16.mxu0 0
        %605 = vmatpush1.bf16.msra.mxu0 %v589
        %606 = vmatprep.subr.bf16.mxu0 0
        %607 = vmatpush1.bf16.msra.mxu0 %v588
        %608 = vmatprep.subr.bf16.mxu0 0
        %609 = vmatpush1.bf16.msra.mxu0 %v587
        %610 = vmatprep.subr.bf16.mxu0 0
        %611 = vmatpush1.bf16.msra.mxu0 %v586
        %612 = vmatprep.subr.bf16.mxu0 0
        %613 = vmatpush1.bf16.msra.mxu0 %v585
        %614 = vmatprep.subr.bf16.mxu0 0
        %615 = vmatpush1.bf16.msra.mxu0 %v584
        %616 = vmatprep.subr.bf16.mxu0 0
        %617 = vmatpush2.bf16.msra.mxu0 0
        %618 = vmatprep.subr.bf16.mxu0 0
        %619 = vmatpush2.bf16.msra.mxu0 0
        %620 = vmatprep.subr.bf16.mxu0 0
        %621 = vmatpush2.bf16.msra.mxu0 0
        %622 = vmatprep.subr.bf16.mxu0 0
        %623 = vmatpush2.bf16.msra.mxu0 0
        %624 = vmatprep.subr.bf16.mxu0 0
        %625 = vmatpush2.bf16.msra.mxu0 0
        %626 = vmatprep.subr.bf16.mxu0 0
        %627 = vmatpush2.bf16.msra.mxu0 0
        %628 = vmatprep.subr.bf16.mxu0 0
        %629 = vmatpush2.bf16.msra.mxu0 0
        %630 = vmatprep.subr.bf16.mxu0 0
        %631 = vmatpush2.bf16.msra.mxu0 0
        %632 = vmatprep.mubr.bf16.mxu0 0
        %633 = vmatmul.mubr.bf16.gmra.mxu0 %v338
        %v634 = vpop.f32.mrf.mxu0
        %v635 = vadd.f32 0.0, %v634
        %v636 = vpop.f32.mrf.mxu0
        %v637 = vpop.f32.mrf.mxu0
        %v638 = vadd.f32 0.0, %v637
        %v639 = vpop.f32.mrf.mxu0
        %640 = vmatprep.mubr.bf16.mxu0 0
        %641 = vmatmul.mubr.bf16.gmra.mxu0 %v350
        %v642 = vpop.f32.mrf.mxu0
        %v643 = vadd.f32 0.0, %v642
        %v644 = vpop.f32.mrf.mxu0
        %v645 = vpop.f32.mrf.mxu0
        %v646 = vadd.f32 0.0, %v645
        %v647 = vpop.f32.mrf.mxu0
        %648 = vmatprep.mubr.bf16.mxu0 0
        %649 = vmatmul.mubr.bf16.gmra.mxu0 %v362
        %v650 = vpop.f32.mrf.mxu0
        %v651 = vadd.f32 0.0, %v650
        %v652 = vpop.f32.mrf.mxu0
        %v653 = vpop.f32.mrf.mxu0
        %v654 = vadd.f32 0.0, %v653
        %v655 = vpop.f32.mrf.mxu0
        %656 = vmatprep.mubr.bf16.mxu0 0
        %657 = vmatmul.mubr.bf16.gmra.mxu0 %v374
        %v658 = vpop.f32.mrf.mxu0
        %v659 = vadd.f32 0.0, %v658
        %v660 = vpop.f32.mrf.mxu0
        %v661 = vpop.f32.mrf.mxu0
        %v662 = vadd.f32 0.0, %v661
        %v663 = vpop.f32.mrf.mxu0
        %664 = vmatprep.mubr.bf16.mxu0 0
        %665 = vmatmul.mubr.bf16.gmra.mxu0 %v386
        %v666 = vpop.f32.mrf.mxu0
        %v667 = vadd.f32 0.0, %v666
        %v668 = vpop.f32.mrf.mxu0
        %v669 = vpop.f32.mrf.mxu0
        %v670 = vadd.f32 0.0, %v669
        %v671 = vpop.f32.mrf.mxu0
        %672 = vmatprep.mubr.bf16.mxu0 0
        %673 = vmatmul.mubr.bf16.gmra.mxu0 %v398
        %v674 = vpop.f32.mrf.mxu0
        %v675 = vadd.f32 0.0, %v674
        %v676 = vpop.f32.mrf.mxu0
        %v677 = vpop.f32.mrf.mxu0
        %v678 = vadd.f32 0.0, %v677
        %v679 = vpop.f32.mrf.mxu0
        %680 = vmatprep.mubr.bf16.mxu0 0
        %681 = vmatmul.mubr.bf16.gmra.mxu0 %v410
        %v682 = vpop.f32.mrf.mxu0
        %v683 = vadd.f32 0.0, %v682
        %v684 = vpop.f32.mrf.mxu0
        %v685 = vpop.f32.mrf.mxu0
        %v686 = vadd.f32 0.0, %v685
        %v687 = vpop.f32.mrf.mxu0
        %688 = vmatprep.mubr.bf16.mxu0 0
        %689 = vmatmul.mubr.bf16.gmra.mxu0 %v422
        %v690 = vpop.f32.mrf.mxu0
        %v691 = vadd.f32 0.0, %v690
        %v692 = vpop.f32.mrf.mxu0
        %v693 = vpop.f32.mrf.mxu0
        %v694 = vadd.f32 0.0, %v693
        %v695 = vpop.f32.mrf.mxu0
        %696 = vmatprep.mubr.bf16.mxu0 0
        %697 = vmatmul.mubr.bf16.gmra.mxu0 %v434
        %v698 = vpop.f32.mrf.mxu0
        %v699 = vadd.f32 0.0, %v698
        %v700 = vpop.f32.mrf.mxu0
        %v701 = vpop.f32.mrf.mxu0
        %v702 = vadd.f32 0.0, %v701
        %v703 = vpop.f32.mrf.mxu0
        %704 = vmatprep.mubr.bf16.mxu0 0
        %705 = vmatmul.mubr.bf16.gmra.mxu0 %v446
        %v706 = vpop.f32.mrf.mxu0
        %v707 = vadd.f32 0.0, %v706
        %v708 = vpop.f32.mrf.mxu0
        %v709 = vpop.f32.mrf.mxu0
        %v710 = vadd.f32 0.0, %v709
        %v711 = vpop.f32.mrf.mxu0
        %712 = vmatprep.mubr.bf16.mxu0 0
        %713 = vmatmul.mubr.bf16.gmra.mxu0 %v458
        %v714 = vpop.f32.mrf.mxu0
        %v715 = vadd.f32 0.0, %v714
        %v716 = vpop.f32.mrf.mxu0
        %v717 = vpop.f32.mrf.mxu0
        %v718 = vadd.f32 0.0, %v717
        %v719 = vpop.f32.mrf.mxu0
        %720 = vmatprep.mubr.bf16.mxu0 0
        %721 = vmatmul.mubr.bf16.gmra.mxu0 %v470
        %v722 = vpop.f32.mrf.mxu0
        %v723 = vadd.f32 0.0, %v722
        %v724 = vpop.f32.mrf.mxu0
        %v725 = vpop.f32.mrf.mxu0
        %v726 = vadd.f32 0.0, %v725
        %v727 = vpop.f32.mrf.mxu0
        %728 = vmatprep.mubr.bf16.mxu0 0
        %729 = vmatmul.mubr.bf16.gmra.mxu0 %v482
        %v730 = vpop.f32.mrf.mxu0
        %v731 = vadd.f32 0.0, %v730
        %v732 = vpop.f32.mrf.mxu0
        %v733 = vpop.f32.mrf.mxu0
        %v734 = vadd.f32 0.0, %v733
        %v735 = vpop.f32.mrf.mxu0
        %736 = vmatprep.mubr.bf16.mxu0 0
        %737 = vmatmul.mubr.bf16.gmra.mxu0 %v494
        %v738 = vpop.f32.mrf.mxu0
        %v739 = vadd.f32 0.0, %v738
        %v740 = vpop.f32.mrf.mxu0
        %v741 = vpop.f32.mrf.mxu0
        %v742 = vadd.f32 0.0, %v741
        %v743 = vpop.f32.mrf.mxu0
        %744 = vmatprep.mubr.bf16.mxu0 0
        %745 = vmatmul.mubr.bf16.gmra.mxu0 %v506
        %v746 = vpop.f32.mrf.mxu0
        %v747 = vadd.f32 0.0, %v746
        %v748 = vpop.f32.mrf.mxu0
        %v749 = vpop.f32.mrf.mxu0
        %v750 = vadd.f32 0.0, %v749
        %v751 = vpop.f32.mrf.mxu0
        %752 = vmatprep.mubr.bf16.mxu0 0
        %753 = vmatmul.mubr.bf16.gmra.mxu0 %v518
        %v754 = vpop.f32.mrf.mxu0
        %v755 = vadd.f32 0.0, %v754
        %v756 = vpop.f32.mrf.mxu0
        %v757 = vpop.f32.mrf.mxu0
        %v758 = vadd.f32 0.0, %v757
        %v759 = vpop.f32.mrf.mxu0
        %760 = vdwg.mxu0
        %v777 = vunpack.c.l.b16 %v294
        %v778 = vunpack.c.l.b16 %v295
        %v779 = vunpack.c.l.b16 %v296
        %v780 = vunpack.c.l.b16 %v297
        %v781 = vunpack.c.l.b16 %v298
        %v782 = vunpack.c.l.b16 %v299
        %v783 = vunpack.c.l.b16 %v300
        %v784 = vunpack.c.l.b16 %v301
        %v785 = vunpack.c.l.b16 %v302
        %v786 = vunpack.c.l.b16 %v303
        %v787 = vunpack.c.l.b16 %v304
        %v788 = vunpack.c.l.b16 %v305
        %v789 = vunpack.c.l.b16 %v306
        %v790 = vunpack.c.l.b16 %v307
        %v791 = vunpack.c.l.b16 %v308
        %v792 = vunpack.c.l.b16 %v309
        %v793 = vpack.c.b16 %v778, %v777
        %v794 = vpack.c.b16 %v780, %v779
        %v795 = vpack.c.b16 %v782, %v781
        %v796 = vpack.c.b16 %v784, %v783
        %v797 = vpack.c.b16 %v786, %v785
        %v798 = vpack.c.b16 %v788, %v787
        %v799 = vpack.c.b16 %v790, %v789
        %v800 = vpack.c.b16 %v792, %v791
        %809 = vmatprep.subr.bf16.mxu0 0
        %810 = vmatpush1.bf16.msra.mxu0 %v800
        %811 = vmatprep.subr.bf16.mxu0 0
        %812 = vmatpush1.bf16.msra.mxu0 %v799
        %813 = vmatprep.subr.bf16.mxu0 0
        %814 = vmatpush1.bf16.msra.mxu0 %v798
        %815 = vmatprep.subr.bf16.mxu0 0
        %816 = vmatpush1.bf16.msra.mxu0 %v797
        %817 = vmatprep.subr.bf16.mxu0 0
        %818 = vmatpush1.bf16.msra.mxu0 %v796
        %819 = vmatprep.subr.bf16.mxu0 0
        %820 = vmatpush1.bf16.msra.mxu0 %v795
        %821 = vmatprep.subr.bf16.mxu0 0
        %822 = vmatpush1.bf16.msra.mxu0 %v794
        %823 = vmatprep.subr.bf16.mxu0 0
        %824 = vmatpush1.bf16.msra.mxu0 %v793
        %825 = vmatprep.subr.bf16.mxu0 0
        %826 = vmatpush2.bf16.msra.mxu0 0
        %827 = vmatprep.subr.bf16.mxu0 0
        %828 = vmatpush2.bf16.msra.mxu0 0
        %829 = vmatprep.subr.bf16.mxu0 0
        %830 = vmatpush2.bf16.msra.mxu0 0
        %831 = vmatprep.subr.bf16.mxu0 0
        %832 = vmatpush2.bf16.msra.mxu0 0
        %833 = vmatprep.subr.bf16.mxu0 0
        %834 = vmatpush2.bf16.msra.mxu0 0
        %835 = vmatprep.subr.bf16.mxu0 0
        %836 = vmatpush2.bf16.msra.mxu0 0
        %837 = vmatprep.subr.bf16.mxu0 0
        %838 = vmatpush2.bf16.msra.mxu0 0
        %839 = vmatprep.subr.bf16.mxu0 0
        %840 = vmatpush2.bf16.msra.mxu0 0
        %841 = vmatprep.mubr.bf16.mxu0 0
        %842 = vmatmul.mubr.bf16.gmra.mxu0 %v278
        %v843 = vpop.f32.mrf.mxu0
        %v844 = vadd.f32 %v635, %v843
        %v845 = vpop.f32.mrf.mxu0
        %v846 = vpop.f32.mrf.mxu0
        %v847 = vadd.f32 %v638, %v846
        %v848 = vpop.f32.mrf.mxu0
        %849 = vmatprep.mubr.bf16.mxu0 0
        %850 = vmatmul.mubr.bf16.gmra.mxu0 %v279
        %v851 = vpop.f32.mrf.mxu0
        %v852 = vadd.f32 %v643, %v851
        %v853 = vpop.f32.mrf.mxu0
        %v854 = vpop.f32.mrf.mxu0
        %v855 = vadd.f32 %v646, %v854
        %v856 = vpop.f32.mrf.mxu0
        %857 = vmatprep.mubr.bf16.mxu0 0
        %858 = vmatmul.mubr.bf16.gmra.mxu0 %v280
        %v859 = vpop.f32.mrf.mxu0
        %v860 = vadd.f32 %v651, %v859
        %v861 = vpop.f32.mrf.mxu0
        %v862 = vpop.f32.mrf.mxu0
        %v863 = vadd.f32 %v654, %v862
        %v864 = vpop.f32.mrf.mxu0
        %865 = vmatprep.mubr.bf16.mxu0 0
        %866 = vmatmul.mubr.bf16.gmra.mxu0 %v281
        %v867 = vpop.f32.mrf.mxu0
        %v868 = vadd.f32 %v659, %v867
        %v869 = vpop.f32.mrf.mxu0
        %v870 = vpop.f32.mrf.mxu0
        %v871 = vadd.f32 %v662, %v870
        %v872 = vpop.f32.mrf.mxu0
        %873 = vmatprep.mubr.bf16.mxu0 0
        %874 = vmatmul.mubr.bf16.gmra.mxu0 %v282
        %v875 = vpop.f32.mrf.mxu0
        %v876 = vadd.f32 %v667, %v875
        %v877 = vpop.f32.mrf.mxu0
        %v878 = vpop.f32.mrf.mxu0
        %v879 = vadd.f32 %v670, %v878
        %v880 = vpop.f32.mrf.mxu0
        %881 = vmatprep.mubr.bf16.mxu0 0
        %882 = vmatmul.mubr.bf16.gmra.mxu0 %v283
        %v883 = vpop.f32.mrf.mxu0
        %v884 = vadd.f32 %v675, %v883
        %v885 = vpop.f32.mrf.mxu0
        %v886 = vpop.f32.mrf.mxu0
        %v887 = vadd.f32 %v678, %v886
        %v888 = vpop.f32.mrf.mxu0
        %889 = vmatprep.mubr.bf16.mxu0 0
        %890 = vmatmul.mubr.bf16.gmra.mxu0 %v284
        %v891 = vpop.f32.mrf.mxu0
        %v892 = vadd.f32 %v683, %v891
        %v893 = vpop.f32.mrf.mxu0
        %v894 = vpop.f32.mrf.mxu0
        %v895 = vadd.f32 %v686, %v894
        %v896 = vpop.f32.mrf.mxu0
        %897 = vmatprep.mubr.bf16.mxu0 0
        %898 = vmatmul.mubr.bf16.gmra.mxu0 %v285
        %v899 = vpop.f32.mrf.mxu0
        %v900 = vadd.f32 %v691, %v899
        %v901 = vpop.f32.mrf.mxu0
        %v902 = vpop.f32.mrf.mxu0
        %v903 = vadd.f32 %v694, %v902
        %v904 = vpop.f32.mrf.mxu0
        %905 = vmatprep.mubr.bf16.mxu0 0
        %906 = vmatmul.mubr.bf16.gmra.mxu0 %v286
        %v907 = vpop.f32.mrf.mxu0
        %v908 = vadd.f32 %v699, %v907
        %v909 = vpop.f32.mrf.mxu0
        %v910 = vpop.f32.mrf.mxu0
        %v911 = vadd.f32 %v702, %v910
        %v912 = vpop.f32.mrf.mxu0
        %913 = vmatprep.mubr.bf16.mxu0 0
        %914 = vmatmul.mubr.bf16.gmra.mxu0 %v287
        %v915 = vpop.f32.mrf.mxu0
        %v916 = vadd.f32 %v707, %v915
        %v917 = vpop.f32.mrf.mxu0
        %v918 = vpop.f32.mrf.mxu0
        %v919 = vadd.f32 %v710, %v918
        %v920 = vpop.f32.mrf.mxu0
        %921 = vmatprep.mubr.bf16.mxu0 0
        %922 = vmatmul.mubr.bf16.gmra.mxu0 %v288
        %v923 = vpop.f32.mrf.mxu0
        %v924 = vadd.f32 %v715, %v923
        %v925 = vpop.f32.mrf.mxu0
        %v926 = vpop.f32.mrf.mxu0
        %v927 = vadd.f32 %v718, %v926
        %v928 = vpop.f32.mrf.mxu0
        %929 = vmatprep.mubr.bf16.mxu0 0
        %930 = vmatmul.mubr.bf16.gmra.mxu0 %v289
        %v931 = vpop.f32.mrf.mxu0
        %v932 = vadd.f32 %v723, %v931
        %v933 = vpop.f32.mrf.mxu0
        %v934 = vpop.f32.mrf.mxu0
        %v935 = vadd.f32 %v726, %v934
        %v936 = vpop.f32.mrf.mxu0
        %937 = vmatprep.mubr.bf16.mxu0 0
        %938 = vmatmul.mubr.bf16.gmra.mxu0 %v290
        %v939 = vpop.f32.mrf.mxu0
        %v940 = vadd.f32 %v731, %v939
        %v941 = vpop.f32.mrf.mxu0
        %v942 = vpop.f32.mrf.mxu0
        %v943 = vadd.f32 %v734, %v942
        %v944 = vpop.f32.mrf.mxu0
        %945 = vmatprep.mubr.bf16.mxu0 0
        %946 = vmatmul.mubr.bf16.gmra.mxu0 %v291
        %v947 = vpop.f32.mrf.mxu0
        %v948 = vadd.f32 %v739, %v947
        %v949 = vpop.f32.mrf.mxu0
        %v950 = vpop.f32.mrf.mxu0
        %v951 = vadd.f32 %v742, %v950
        %v952 = vpop.f32.mrf.mxu0
        %953 = vmatprep.mubr.bf16.mxu0 0
        %954 = vmatmul.mubr.bf16.gmra.mxu0 %v292
        %v955 = vpop.f32.mrf.mxu0
        %v956 = vadd.f32 %v747, %v955
        %v957 = vpop.f32.mrf.mxu0
        %v958 = vpop.f32.mrf.mxu0
        %v959 = vadd.f32 %v750, %v958
        %v960 = vpop.f32.mrf.mxu0
        %961 = vmatprep.mubr.bf16.mxu0 0
        %962 = vmatmul.mubr.bf16.gmra.mxu0 %v293
        %v963 = vpop.f32.mrf.mxu0
        %v964 = vadd.f32 %v755, %v963
        %v965 = vpop.f32.mrf.mxu0
        %v966 = vpop.f32.mrf.mxu0
        %v967 = vadd.f32 %v758, %v966
        %v968 = vpop.f32.mrf.mxu0
        %969 = vdwg.mxu0
        %vm1002 = vcmask 1046528
        %v1003 = vrot.slane %v278, 1
        %v1004 = vrot.slane %v310, 1
        %v1005 = vsel %vm1002, %v1003, %v1004
        %v1006 = vrot.slane %v279, 1
        %v1007 = vrot.slane %v311, 1
        %v1008 = vsel %vm1002, %v1006, %v1007
        %v1009 = vrot.slane %v280, 1
        %v1010 = vrot.slane %v312, 1
        %v1011 = vsel %vm1002, %v1009, %v1010
        %v1012 = vrot.slane %v281, 1
        %v1013 = vrot.slane %v313, 1
        %v1014 = vsel %vm1002, %v1012, %v1013
        %v1015 = vrot.slane %v282, 1
        %v1016 = vrot.slane %v314, 1
        %v1017 = vsel %vm1002, %v1015, %v1016
        %v1018 = vrot.slane %v283, 1
        %v1019 = vrot.slane %v315, 1
        %v1020 = vsel %vm1002, %v1018, %v1019
        %v1021 = vrot.slane %v284, 1
        %v1022 = vrot.slane %v316, 1
        %v1023 = vsel %vm1002, %v1021, %v1022
        %v1024 = vrot.slane %v285, 1
        %v1025 = vrot.slane %v317, 1
        %v1026 = vsel %vm1002, %v1024, %v1025
        %v1027 = vrot.slane %v286, 1
        %v1028 = vrot.slane %v318, 1
        %v1029 = vsel %vm1002, %v1027, %v1028
        %v1030 = vrot.slane %v287, 1
        %v1031 = vrot.slane %v319, 1
        %v1032 = vsel %vm1002, %v1030, %v1031
        %v1033 = vrot.slane %v288, 1
        %v1034 = vrot.slane %v320, 1
        %v1035 = vsel %vm1002, %v1033, %v1034
        %v1036 = vrot.slane %v289, 1
        %v1037 = vrot.slane %v321, 1
        %v1038 = vsel %vm1002, %v1036, %v1037
        %v1039 = vrot.slane %v290, 1
        %v1040 = vrot.slane %v322, 1
        %v1041 = vsel %vm1002, %v1039, %v1040
        %v1042 = vrot.slane %v291, 1
        %v1043 = vrot.slane %v323, 1
        %v1044 = vsel %vm1002, %v1042, %v1043
        %v1045 = vrot.slane %v292, 1
        %v1046 = vrot.slane %v324, 1
        %v1047 = vsel %vm1002, %v1045, %v1046
        %v1048 = vrot.slane %v293, 1
        %v1049 = vrot.slane %v325, 1
        %v1050 = vsel %vm1002, %v1048, %v1049
        %s1067 = scalar_lea.vmem %s1, 128
        %v1068 = vld [vmem:[%s1067] sm:$0xf]
        %v1069 = vld [vmem:[%s1067 + $0x4] sm:$0xf]
        %v1070 = vld [vmem:[%s1067 + $0x8] sm:$0xf]
        %v1071 = vld [vmem:[%s1067 + $0xc] sm:$0xf]
        %v1072 = vld [vmem:[%s1067 + $0x10] sm:$0xf]
        %v1073 = vld [vmem:[%s1067 + $0x14] sm:$0xf]
        %v1074 = vld [vmem:[%s1067 + $0x18] sm:$0xf]
        %v1075 = vld [vmem:[%s1067 + $0x1c] sm:$0xf]
        %v1076 = vld [vmem:[%s1067 + $0x20] sm:$0xf]
        %v1077 = vld [vmem:[%s1067 + $0x24] sm:$0xf]
        %v1078 = vld [vmem:[%s1067 + $0x28] sm:$0xf]
        %v1079 = vld [vmem:[%s1067 + $0x2c] sm:$0xf]
        %v1080 = vld [vmem:[%s1067 + $0x30] sm:$0xf]
        %v1081 = vld [vmem:[%s1067 + $0x34] sm:$0xf]
        %v1082 = vld [vmem:[%s1067 + $0x38] sm:$0xf]
        %v1083 = vld [vmem:[%s1067 + $0x3c] sm:$0xf]
        %v1100 = vunpack.c.l.b16 %v1068
        %v1101 = vunpack.c.l.b16 %v1069
        %v1102 = vunpack.c.l.b16 %v1070
        %v1103 = vunpack.c.l.b16 %v1071
        %v1104 = vunpack.c.l.b16 %v1072
        %v1105 = vunpack.c.l.b16 %v1073
        %v1106 = vunpack.c.l.b16 %v1074
        %v1107 = vunpack.c.l.b16 %v1075
        %v1108 = vunpack.c.l.b16 %v1076
        %v1109 = vunpack.c.l.b16 %v1077
        %v1110 = vunpack.c.l.b16 %v1078
        %v1111 = vunpack.c.l.b16 %v1079
        %v1112 = vunpack.c.l.b16 %v1080
        %v1113 = vunpack.c.l.b16 %v1081
        %v1114 = vunpack.c.l.b16 %v1082
        %v1115 = vunpack.c.l.b16 %v1083
        %v1116 = vpack.c.b16 %v1101, %v1100
        %v1117 = vpack.c.b16 %v1103, %v1102
        %v1118 = vpack.c.b16 %v1105, %v1104
        %v1119 = vpack.c.b16 %v1107, %v1106
        %v1120 = vpack.c.b16 %v1109, %v1108
        %v1121 = vpack.c.b16 %v1111, %v1110
        %v1122 = vpack.c.b16 %v1113, %v1112
        %v1123 = vpack.c.b16 %v1115, %v1114
        %1132 = vmatprep.subr.bf16.mxu0 0
        %1133 = vmatpush1.bf16.msra.mxu0 %v1123
        %1134 = vmatprep.subr.bf16.mxu0 0
        %1135 = vmatpush1.bf16.msra.mxu0 %v1122
        %1136 = vmatprep.subr.bf16.mxu0 0
        %1137 = vmatpush1.bf16.msra.mxu0 %v1121
        %1138 = vmatprep.subr.bf16.mxu0 0
        %1139 = vmatpush1.bf16.msra.mxu0 %v1120
        %1140 = vmatprep.subr.bf16.mxu0 0
        %1141 = vmatpush1.bf16.msra.mxu0 %v1119
        %1142 = vmatprep.subr.bf16.mxu0 0
        %1143 = vmatpush1.bf16.msra.mxu0 %v1118
        %1144 = vmatprep.subr.bf16.mxu0 0
        %1145 = vmatpush1.bf16.msra.mxu0 %v1117
        %1146 = vmatprep.subr.bf16.mxu0 0
        %1147 = vmatpush1.bf16.msra.mxu0 %v1116
        %1148 = vmatprep.subr.bf16.mxu0 0
        %1149 = vmatpush2.bf16.msra.mxu0 0
        %1150 = vmatprep.subr.bf16.mxu0 0
        %1151 = vmatpush2.bf16.msra.mxu0 0
        %1152 = vmatprep.subr.bf16.mxu0 0
        %1153 = vmatpush2.bf16.msra.mxu0 0
        %1154 = vmatprep.subr.bf16.mxu0 0
        %1155 = vmatpush2.bf16.msra.mxu0 0
        %1156 = vmatprep.subr.bf16.mxu0 0
        %1157 = vmatpush2.bf16.msra.mxu0 0
        %1158 = vmatprep.subr.bf16.mxu0 0
        %1159 = vmatpush2.bf16.msra.mxu0 0
        %1160 = vmatprep.subr.bf16.mxu0 0
        %1161 = vmatpush2.bf16.msra.mxu0 0
        %1162 = vmatprep.subr.bf16.mxu0 0
        %1163 = vmatpush2.bf16.msra.mxu0 0
        %1164 = vmatprep.mubr.bf16.mxu0 0
        %1165 = vmatmul.mubr.bf16.gmra.mxu0 %v1005
        %v1166 = vpop.f32.mrf.mxu0
        %v1167 = vadd.f32 0.0, %v1166
        %v1168 = vpop.f32.mrf.mxu0
        %v1169 = vpop.f32.mrf.mxu0
        %v1170 = vadd.f32 0.0, %v1169
        %v1171 = vpop.f32.mrf.mxu0
        %1172 = vmatprep.mubr.bf16.mxu0 0
        %1173 = vmatmul.mubr.bf16.gmra.mxu0 %v1008
        %v1174 = vpop.f32.mrf.mxu0
        %v1175 = vadd.f32 0.0, %v1174
        %v1176 = vpop.f32.mrf.mxu0
        %v1177 = vpop.f32.mrf.mxu0
        %v1178 = vadd.f32 0.0, %v1177
        %v1179 = vpop.f32.mrf.mxu0
        %1180 = vmatprep.mubr.bf16.mxu0 0
        %1181 = vmatmul.mubr.bf16.gmra.mxu0 %v1011
        %v1182 = vpop.f32.mrf.mxu0
        %v1183 = vadd.f32 0.0, %v1182
        %v1184 = vpop.f32.mrf.mxu0
        %v1185 = vpop.f32.mrf.mxu0
        %v1186 = vadd.f32 0.0, %v1185
        %v1187 = vpop.f32.mrf.mxu0
        %1188 = vmatprep.mubr.bf16.mxu0 0
        %1189 = vmatmul.mubr.bf16.gmra.mxu0 %v1014
        %v1190 = vpop.f32.mrf.mxu0
        %v1191 = vadd.f32 0.0, %v1190
        %v1192 = vpop.f32.mrf.mxu0
        %v1193 = vpop.f32.mrf.mxu0
        %v1194 = vadd.f32 0.0, %v1193
        %v1195 = vpop.f32.mrf.mxu0
        %1196 = vmatprep.mubr.bf16.mxu0 0
        %1197 = vmatmul.mubr.bf16.gmra.mxu0 %v1017
        %v1198 = vpop.f32.mrf.mxu0
        %v1199 = vadd.f32 0.0, %v1198
        %v1200 = vpop.f32.mrf.mxu0
        %v1201 = vpop.f32.mrf.mxu0
        %v1202 = vadd.f32 0.0, %v1201
        %v1203 = vpop.f32.mrf.mxu0
        %1204 = vmatprep.mubr.bf16.mxu0 0
        %1205 = vmatmul.mubr.bf16.gmra.mxu0 %v1020
        %v1206 = vpop.f32.mrf.mxu0
        %v1207 = vadd.f32 0.0, %v1206
        %v1208 = vpop.f32.mrf.mxu0
        %v1209 = vpop.f32.mrf.mxu0
        %v1210 = vadd.f32 0.0, %v1209
        %v1211 = vpop.f32.mrf.mxu0
        %1212 = vmatprep.mubr.bf16.mxu0 0
        %1213 = vmatmul.mubr.bf16.gmra.mxu0 %v1023
        %v1214 = vpop.f32.mrf.mxu0
        %v1215 = vadd.f32 0.0, %v1214
        %v1216 = vpop.f32.mrf.mxu0
        %v1217 = vpop.f32.mrf.mxu0
        %v1218 = vadd.f32 0.0, %v1217
        %v1219 = vpop.f32.mrf.mxu0
        %1220 = vmatprep.mubr.bf16.mxu0 0
        %1221 = vmatmul.mubr.bf16.gmra.mxu0 %v1026
        %v1222 = vpop.f32.mrf.mxu0
        %v1223 = vadd.f32 0.0, %v1222
        %v1224 = vpop.f32.mrf.mxu0
        %v1225 = vpop.f32.mrf.mxu0
        %v1226 = vadd.f32 0.0, %v1225
        %v1227 = vpop.f32.mrf.mxu0
        %1228 = vmatprep.mubr.bf16.mxu0 0
        %1229 = vmatmul.mubr.bf16.gmra.mxu0 %v1029
        %v1230 = vpop.f32.mrf.mxu0
        %v1231 = vadd.f32 0.0, %v1230
        %v1232 = vpop.f32.mrf.mxu0
        %v1233 = vpop.f32.mrf.mxu0
        %v1234 = vadd.f32 0.0, %v1233
        %v1235 = vpop.f32.mrf.mxu0
        %1236 = vmatprep.mubr.bf16.mxu0 0
        %1237 = vmatmul.mubr.bf16.gmra.mxu0 %v1032
        %v1238 = vpop.f32.mrf.mxu0
        %v1239 = vadd.f32 0.0, %v1238
        %v1240 = vpop.f32.mrf.mxu0
        %v1241 = vpop.f32.mrf.mxu0
        %v1242 = vadd.f32 0.0, %v1241
        %v1243 = vpop.f32.mrf.mxu0
        %1244 = vmatprep.mubr.bf16.mxu0 0
        %1245 = vmatmul.mubr.bf16.gmra.mxu0 %v1035
        %v1246 = vpop.f32.mrf.mxu0
        %v1247 = vadd.f32 0.0, %v1246
        %v1248 = vpop.f32.mrf.mxu0
        %v1249 = vpop.f32.mrf.mxu0
        %v1250 = vadd.f32 0.0, %v1249
        %v1251 = vpop.f32.mrf.mxu0
        %1252 = vmatprep.mubr.bf16.mxu0 0
        %1253 = vmatmul.mubr.bf16.gmra.mxu0 %v1038
        %v1254 = vpop.f32.mrf.mxu0
        %v1255 = vadd.f32 0.0, %v1254
        %v1256 = vpop.f32.mrf.mxu0
        %v1257 = vpop.f32.mrf.mxu0
        %v1258 = vadd.f32 0.0, %v1257
        %v1259 = vpop.f32.mrf.mxu0
        %1260 = vmatprep.mubr.bf16.mxu0 0
        %1261 = vmatmul.mubr.bf16.gmra.mxu0 %v1041
        %v1262 = vpop.f32.mrf.mxu0
        %v1263 = vadd.f32 0.0, %v1262
        %v1264 = vpop.f32.mrf.mxu0
        %v1265 = vpop.f32.mrf.mxu0
        %v1266 = vadd.f32 0.0, %v1265
        %v1267 = vpop.f32.mrf.mxu0
        %1268 = vmatprep.mubr.bf16.mxu0 0
        %1269 = vmatmul.mubr.bf16.gmra.mxu0 %v1044
        %v1270 = vpop.f32.mrf.mxu0
        %v1271 = vadd.f32 0.0, %v1270
        %v1272 = vpop.f32.mrf.mxu0
        %v1273 = vpop.f32.mrf.mxu0
        %v1274 = vadd.f32 0.0, %v1273
        %v1275 = vpop.f32.mrf.mxu0
        %1276 = vmatprep.mubr.bf16.mxu0 0
        %1277 = vmatmul.mubr.bf16.gmra.mxu0 %v1047
        %v1278 = vpop.f32.mrf.mxu0
        %v1279 = vadd.f32 0.0, %v1278
        %v1280 = vpop.f32.mrf.mxu0
        %v1281 = vpop.f32.mrf.mxu0
        %v1282 = vadd.f32 0.0, %v1281
        %v1283 = vpop.f32.mrf.mxu0
        %1284 = vmatprep.mubr.bf16.mxu0 0
        %1285 = vmatmul.mubr.bf16.gmra.mxu0 %v1050
        %v1286 = vpop.f32.mrf.mxu0
        %v1287 = vadd.f32 0.0, %v1286
        %v1288 = vpop.f32.mrf.mxu0
        %v1289 = vpop.f32.mrf.mxu0
        %v1290 = vadd.f32 0.0, %v1289
        %v1291 = vpop.f32.mrf.mxu0
        %1292 = vdwg.mxu0
        %v1293 = vadd.f32 %v844, %v1167
        %v1294 = vadd.f32 %v847, %v1170
        %v1295 = vadd.f32 %v852, %v1175
        %v1296 = vadd.f32 %v855, %v1178
        %v1297 = vadd.f32 %v860, %v1183
        %v1298 = vadd.f32 %v863, %v1186
        %v1299 = vadd.f32 %v868, %v1191
        %v1300 = vadd.f32 %v871, %v1194
        %v1301 = vadd.f32 %v876, %v1199
        %v1302 = vadd.f32 %v879, %v1202
        %v1303 = vadd.f32 %v884, %v1207
        %v1304 = vadd.f32 %v887, %v1210
        %v1305 = vadd.f32 %v892, %v1215
        %v1306 = vadd.f32 %v895, %v1218
        %v1307 = vadd.f32 %v900, %v1223
        %v1308 = vadd.f32 %v903, %v1226
        %v1309 = vadd.f32 %v908, %v1231
        %v1310 = vadd.f32 %v911, %v1234
        %v1311 = vadd.f32 %v916, %v1239
        %v1312 = vadd.f32 %v919, %v1242
        %v1313 = vadd.f32 %v924, %v1247
        %v1314 = vadd.f32 %v927, %v1250
        %v1315 = vadd.f32 %v932, %v1255
        %v1316 = vadd.f32 %v935, %v1258
        %v1317 = vadd.f32 %v940, %v1263
        %v1318 = vadd.f32 %v943, %v1266
        %v1319 = vadd.f32 %v948, %v1271
        %v1320 = vadd.f32 %v951, %v1274
        %v1321 = vadd.f32 %v956, %v1279
        %v1322 = vadd.f32 %v959, %v1282
        %v1323 = vadd.f32 %v964, %v1287
        %v1324 = vadd.f32 %v967, %v1290
        %v1325 = vpack.c.bf16 %v273, %v272
        %s1326 = scalar_lea.vmem %s1, 192
        %v1327 = vld [vmem:[%s1326] sm:$0xf]
        %v1328 = vld [vmem:[%s1326 + $0x4] sm:$0xf]
        %v1329 = vld [vmem:[%s1326 + $0x8] sm:$0xf]
        %v1330 = vld [vmem:[%s1326 + $0xc] sm:$0xf]
        %v1331 = vld [vmem:[%s1326 + $0x10] sm:$0xf]
        %v1332 = vld [vmem:[%s1326 + $0x14] sm:$0xf]
        %v1333 = vld [vmem:[%s1326 + $0x18] sm:$0xf]
        %v1334 = vld [vmem:[%s1326 + $0x1c] sm:$0xf]
        %v1335 = vld [vmem:[%s1326 + $0x20] sm:$0xf]
        %v1336 = vld [vmem:[%s1326 + $0x24] sm:$0xf]
        %v1337 = vld [vmem:[%s1326 + $0x28] sm:$0xf]
        %v1338 = vld [vmem:[%s1326 + $0x2c] sm:$0xf]
        %v1339 = vld [vmem:[%s1326 + $0x30] sm:$0xf]
        %v1340 = vld [vmem:[%s1326 + $0x34] sm:$0xf]
        %v1341 = vld [vmem:[%s1326 + $0x38] sm:$0xf]
        %v1342 = vld [vmem:[%s1326 + $0x3c] sm:$0xf]
        %v1359 = vunpack.c.l.b16 %v1327
        %v1360 = vunpack.c.l.b16 %v1328
        %v1361 = vunpack.c.l.b16 %v1329
        %v1362 = vunpack.c.l.b16 %v1330
        %v1363 = vunpack.c.l.b16 %v1331
        %v1364 = vunpack.c.l.b16 %v1332
        %v1365 = vunpack.c.l.b16 %v1333
        %v1366 = vunpack.c.l.b16 %v1334
        %v1367 = vunpack.c.l.b16 %v1335
        %v1368 = vunpack.c.l.b16 %v1336
        %v1369 = vunpack.c.l.b16 %v1337
        %v1370 = vunpack.c.l.b16 %v1338
        %v1371 = vunpack.c.l.b16 %v1339
        %v1372 = vunpack.c.l.b16 %v1340
        %v1373 = vunpack.c.l.b16 %v1341
        %v1374 = vunpack.c.l.b16 %v1342
        %v1375 = vpack.c.b16 %v1360, %v1359
        %v1376 = vpack.c.b16 %v1362, %v1361
        %v1377 = vpack.c.b16 %v1364, %v1363
        %v1378 = vpack.c.b16 %v1366, %v1365
        %v1379 = vpack.c.b16 %v1368, %v1367
        %v1380 = vpack.c.b16 %v1370, %v1369
        %v1381 = vpack.c.b16 %v1372, %v1371
        %v1382 = vpack.c.b16 %v1374, %v1373
        %1391 = vmatprep.subr.bf16.mxu0 0
        %1392 = vmatpush1.bf16.msra.mxu0 %v1382
        %1393 = vmatprep.subr.bf16.mxu0 0
        %1394 = vmatpush1.bf16.msra.mxu0 %v1381
        %1395 = vmatprep.subr.bf16.mxu0 0
        %1396 = vmatpush1.bf16.msra.mxu0 %v1380
        %1397 = vmatprep.subr.bf16.mxu0 0
        %1398 = vmatpush1.bf16.msra.mxu0 %v1379
        %1399 = vmatprep.subr.bf16.mxu0 0
        %1400 = vmatpush1.bf16.msra.mxu0 %v1378
        %1401 = vmatprep.subr.bf16.mxu0 0
        %1402 = vmatpush1.bf16.msra.mxu0 %v1377
        %1403 = vmatprep.subr.bf16.mxu0 0
        %1404 = vmatpush1.bf16.msra.mxu0 %v1376
        %1405 = vmatprep.subr.bf16.mxu0 0
        %1406 = vmatpush1.bf16.msra.mxu0 %v1375
        %1407 = vmatprep.subr.bf16.mxu0 0
        %1408 = vmatpush2.bf16.msra.mxu0 0
        %1409 = vmatprep.subr.bf16.mxu0 0
        %1410 = vmatpush2.bf16.msra.mxu0 0
        %1411 = vmatprep.subr.bf16.mxu0 0
        %1412 = vmatpush2.bf16.msra.mxu0 0
        %1413 = vmatprep.subr.bf16.mxu0 0
        %1414 = vmatpush2.bf16.msra.mxu0 0
        %1415 = vmatprep.subr.bf16.mxu0 0
        %1416 = vmatpush2.bf16.msra.mxu0 0
        %1417 = vmatprep.subr.bf16.mxu0 0
        %1418 = vmatpush2.bf16.msra.mxu0 0
        %1419 = vmatprep.subr.bf16.mxu0 0
        %1420 = vmatpush2.bf16.msra.mxu0 0
        %1421 = vmatprep.subr.bf16.mxu0 0
        %1422 = vmatpush2.bf16.msra.mxu0 0
        %1423 = vmatprep.mubr.bf16.mxu0 0
        %1424 = vmatmul.mubr.bf16.gmra.mxu0 %v279
        %v1425 = vpop.f32.mrf.mxu0
        %v1426 = vadd.f32 0.0, %v1425
        %v1427 = vpop.f32.mrf.mxu0
        %v1428 = vpop.f32.mrf.mxu0
        %v1429 = vadd.f32 0.0, %v1428
        %v1430 = vpop.f32.mrf.mxu0
        %1431 = vmatprep.mubr.bf16.mxu0 0
        %1432 = vmatmul.mubr.bf16.gmra.mxu0 %v280
        %v1433 = vpop.f32.mrf.mxu0
        %v1434 = vadd.f32 0.0, %v1433
        %v1435 = vpop.f32.mrf.mxu0
        %v1436 = vpop.f32.mrf.mxu0
        %v1437 = vadd.f32 0.0, %v1436
        %v1438 = vpop.f32.mrf.mxu0
        %1439 = vmatprep.mubr.bf16.mxu0 0
        %1440 = vmatmul.mubr.bf16.gmra.mxu0 %v281
        %v1441 = vpop.f32.mrf.mxu0
        %v1442 = vadd.f32 0.0, %v1441
        %v1443 = vpop.f32.mrf.mxu0
        %v1444 = vpop.f32.mrf.mxu0
        %v1445 = vadd.f32 0.0, %v1444
        %v1446 = vpop.f32.mrf.mxu0
        %1447 = vmatprep.mubr.bf16.mxu0 0
        %1448 = vmatmul.mubr.bf16.gmra.mxu0 %v282
        %v1449 = vpop.f32.mrf.mxu0
        %v1450 = vadd.f32 0.0, %v1449
        %v1451 = vpop.f32.mrf.mxu0
        %v1452 = vpop.f32.mrf.mxu0
        %v1453 = vadd.f32 0.0, %v1452
        %v1454 = vpop.f32.mrf.mxu0
        %1455 = vmatprep.mubr.bf16.mxu0 0
        %1456 = vmatmul.mubr.bf16.gmra.mxu0 %v283
        %v1457 = vpop.f32.mrf.mxu0
        %v1458 = vadd.f32 0.0, %v1457
        %v1459 = vpop.f32.mrf.mxu0
        %v1460 = vpop.f32.mrf.mxu0
        %v1461 = vadd.f32 0.0, %v1460
        %v1462 = vpop.f32.mrf.mxu0
        %1463 = vmatprep.mubr.bf16.mxu0 0
        %1464 = vmatmul.mubr.bf16.gmra.mxu0 %v284
        %v1465 = vpop.f32.mrf.mxu0
        %v1466 = vadd.f32 0.0, %v1465
        %v1467 = vpop.f32.mrf.mxu0
        %v1468 = vpop.f32.mrf.mxu0
        %v1469 = vadd.f32 0.0, %v1468
        %v1470 = vpop.f32.mrf.mxu0
        %1471 = vmatprep.mubr.bf16.mxu0 0
        %1472 = vmatmul.mubr.bf16.gmra.mxu0 %v285
        %v1473 = vpop.f32.mrf.mxu0
        %v1474 = vadd.f32 0.0, %v1473
        %v1475 = vpop.f32.mrf.mxu0
        %v1476 = vpop.f32.mrf.mxu0
        %v1477 = vadd.f32 0.0, %v1476
        %v1478 = vpop.f32.mrf.mxu0
        %1479 = vmatprep.mubr.bf16.mxu0 0
        %1480 = vmatmul.mubr.bf16.gmra.mxu0 %v286
        %v1481 = vpop.f32.mrf.mxu0
        %v1482 = vadd.f32 0.0, %v1481
        %v1483 = vpop.f32.mrf.mxu0
        %v1484 = vpop.f32.mrf.mxu0
        %v1485 = vadd.f32 0.0, %v1484
        %v1486 = vpop.f32.mrf.mxu0
        %1487 = vmatprep.mubr.bf16.mxu0 0
        %1488 = vmatmul.mubr.bf16.gmra.mxu0 %v287
        %v1489 = vpop.f32.mrf.mxu0
        %v1490 = vadd.f32 0.0, %v1489
        %v1491 = vpop.f32.mrf.mxu0
        %v1492 = vpop.f32.mrf.mxu0
        %v1493 = vadd.f32 0.0, %v1492
        %v1494 = vpop.f32.mrf.mxu0
        %1495 = vmatprep.mubr.bf16.mxu0 0
        %1496 = vmatmul.mubr.bf16.gmra.mxu0 %v288
        %v1497 = vpop.f32.mrf.mxu0
        %v1498 = vadd.f32 0.0, %v1497
        %v1499 = vpop.f32.mrf.mxu0
        %v1500 = vpop.f32.mrf.mxu0
        %v1501 = vadd.f32 0.0, %v1500
        %v1502 = vpop.f32.mrf.mxu0
        %1503 = vmatprep.mubr.bf16.mxu0 0
        %1504 = vmatmul.mubr.bf16.gmra.mxu0 %v289
        %v1505 = vpop.f32.mrf.mxu0
        %v1506 = vadd.f32 0.0, %v1505
        %v1507 = vpop.f32.mrf.mxu0
        %v1508 = vpop.f32.mrf.mxu0
        %v1509 = vadd.f32 0.0, %v1508
        %v1510 = vpop.f32.mrf.mxu0
        %1511 = vmatprep.mubr.bf16.mxu0 0
        %1512 = vmatmul.mubr.bf16.gmra.mxu0 %v290
        %v1513 = vpop.f32.mrf.mxu0
        %v1514 = vadd.f32 0.0, %v1513
        %v1515 = vpop.f32.mrf.mxu0
        %v1516 = vpop.f32.mrf.mxu0
        %v1517 = vadd.f32 0.0, %v1516
        %v1518 = vpop.f32.mrf.mxu0
        %1519 = vmatprep.mubr.bf16.mxu0 0
        %1520 = vmatmul.mubr.bf16.gmra.mxu0 %v291
        %v1521 = vpop.f32.mrf.mxu0
        %v1522 = vadd.f32 0.0, %v1521
        %v1523 = vpop.f32.mrf.mxu0
        %v1524 = vpop.f32.mrf.mxu0
        %v1525 = vadd.f32 0.0, %v1524
        %v1526 = vpop.f32.mrf.mxu0
        %1527 = vmatprep.mubr.bf16.mxu0 0
        %1528 = vmatmul.mubr.bf16.gmra.mxu0 %v292
        %v1529 = vpop.f32.mrf.mxu0
        %v1530 = vadd.f32 0.0, %v1529
        %v1531 = vpop.f32.mrf.mxu0
        %v1532 = vpop.f32.mrf.mxu0
        %v1533 = vadd.f32 0.0, %v1532
        %v1534 = vpop.f32.mrf.mxu0
        %1535 = vmatprep.mubr.bf16.mxu0 0
        %1536 = vmatmul.mubr.bf16.gmra.mxu0 %v293
        %v1537 = vpop.f32.mrf.mxu0
        %v1538 = vadd.f32 0.0, %v1537
        %v1539 = vpop.f32.mrf.mxu0
        %v1540 = vpop.f32.mrf.mxu0
        %v1541 = vadd.f32 0.0, %v1540
        %v1542 = vpop.f32.mrf.mxu0
        %1543 = vmatprep.mubr.bf16.mxu0 0
        %1544 = vmatmul.mubr.bf16.gmra.mxu0 %v1325
        %v1545 = vpop.f32.mrf.mxu0
        %v1546 = vadd.f32 0.0, %v1545
        %v1547 = vpop.f32.mrf.mxu0
        %v1548 = vpop.f32.mrf.mxu0
        %v1549 = vadd.f32 0.0, %v1548
        %v1550 = vpop.f32.mrf.mxu0
        %1551 = vdwg.mxu0
        %v1552 = vadd.f32 %v1293, %v1426
        %v1553 = vadd.f32 %v1294, %v1429
        %v1554 = vadd.f32 %v1295, %v1434
        %v1555 = vadd.f32 %v1296, %v1437
        %v1556 = vadd.f32 %v1297, %v1442
        %v1557 = vadd.f32 %v1298, %v1445
        %v1558 = vadd.f32 %v1299, %v1450
        %v1559 = vadd.f32 %v1300, %v1453
        %v1560 = vadd.f32 %v1301, %v1458
        %v1561 = vadd.f32 %v1302, %v1461
        %v1562 = vadd.f32 %v1303, %v1466
        %v1563 = vadd.f32 %v1304, %v1469
        %v1564 = vadd.f32 %v1305, %v1474
        %v1565 = vadd.f32 %v1306, %v1477
        %v1566 = vadd.f32 %v1307, %v1482
        %v1567 = vadd.f32 %v1308, %v1485
        %v1568 = vadd.f32 %v1309, %v1490
        %v1569 = vadd.f32 %v1310, %v1493
        %v1570 = vadd.f32 %v1311, %v1498
        %v1571 = vadd.f32 %v1312, %v1501
        %v1572 = vadd.f32 %v1313, %v1506
        %v1573 = vadd.f32 %v1314, %v1509
        %v1574 = vadd.f32 %v1315, %v1514
        %v1575 = vadd.f32 %v1316, %v1517
        %v1576 = vadd.f32 %v1317, %v1522
        %v1577 = vadd.f32 %v1318, %v1525
        %v1578 = vadd.f32 %v1319, %v1530
        %v1579 = vadd.f32 %v1320, %v1533
        %v1580 = vadd.f32 %v1321, %v1538
        %v1581 = vadd.f32 %v1322, %v1541
        %v1582 = vadd.f32 %v1323, %v1546
        %v1583 = vadd.f32 %v1324, %v1549
        %v1584 = vpack.c.bf16 %v274, %v274
        %v1586 = vshrl.u32 %v1325, 16
        %v1588 = vshll.u32 %v1325, 16
        %v1590 = vrot.slane %v1588, 1
        %v1591 = vor.u32 %v1586, %v1590
        %v1593 = vshll.u32 %v1584, 16
        %v1595 = vrot.slane %v1593, 1
        %v1596 = vsel %vm326, %v1591, %v1595
        %s1598 = scalar_lea.vmem %s1, 256
        %v1599 = vld [vmem:[%s1598] sm:$0xf]
        %v1600 = vld [vmem:[%s1598 + $0x4] sm:$0xf]
        %v1601 = vld [vmem:[%s1598 + $0x8] sm:$0xf]
        %v1602 = vld [vmem:[%s1598 + $0xc] sm:$0xf]
        %v1603 = vld [vmem:[%s1598 + $0x10] sm:$0xf]
        %v1604 = vld [vmem:[%s1598 + $0x14] sm:$0xf]
        %v1605 = vld [vmem:[%s1598 + $0x18] sm:$0xf]
        %v1606 = vld [vmem:[%s1598 + $0x1c] sm:$0xf]
        %v1607 = vld [vmem:[%s1598 + $0x20] sm:$0xf]
        %v1608 = vld [vmem:[%s1598 + $0x24] sm:$0xf]
        %v1609 = vld [vmem:[%s1598 + $0x28] sm:$0xf]
        %v1610 = vld [vmem:[%s1598 + $0x2c] sm:$0xf]
        %v1611 = vld [vmem:[%s1598 + $0x30] sm:$0xf]
        %v1612 = vld [vmem:[%s1598 + $0x34] sm:$0xf]
        %v1613 = vld [vmem:[%s1598 + $0x38] sm:$0xf]
        %v1614 = vld [vmem:[%s1598 + $0x3c] sm:$0xf]
        %v1631 = vunpack.c.l.b16 %v1599
        %v1632 = vunpack.c.l.b16 %v1600
        %v1633 = vunpack.c.l.b16 %v1601
        %v1634 = vunpack.c.l.b16 %v1602
        %v1635 = vunpack.c.l.b16 %v1603
        %v1636 = vunpack.c.l.b16 %v1604
        %v1637 = vunpack.c.l.b16 %v1605
        %v1638 = vunpack.c.l.b16 %v1606
        %v1639 = vunpack.c.l.b16 %v1607
        %v1640 = vunpack.c.l.b16 %v1608
        %v1641 = vunpack.c.l.b16 %v1609
        %v1642 = vunpack.c.l.b16 %v1610
        %v1643 = vunpack.c.l.b16 %v1611
        %v1644 = vunpack.c.l.b16 %v1612
        %v1645 = vunpack.c.l.b16 %v1613
        %v1646 = vunpack.c.l.b16 %v1614
        %v1647 = vpack.c.b16 %v1632, %v1631
        %v1648 = vpack.c.b16 %v1634, %v1633
        %v1649 = vpack.c.b16 %v1636, %v1635
        %v1650 = vpack.c.b16 %v1638, %v1637
        %v1651 = vpack.c.b16 %v1640, %v1639
        %v1652 = vpack.c.b16 %v1642, %v1641
        %v1653 = vpack.c.b16 %v1644, %v1643
        %v1654 = vpack.c.b16 %v1646, %v1645
        %1663 = vmatprep.subr.bf16.mxu0 0
        %1664 = vmatpush1.bf16.msra.mxu0 %v1654
        %1665 = vmatprep.subr.bf16.mxu0 0
        %1666 = vmatpush1.bf16.msra.mxu0 %v1653
        %1667 = vmatprep.subr.bf16.mxu0 0
        %1668 = vmatpush1.bf16.msra.mxu0 %v1652
        %1669 = vmatprep.subr.bf16.mxu0 0
        %1670 = vmatpush1.bf16.msra.mxu0 %v1651
        %1671 = vmatprep.subr.bf16.mxu0 0
        %1672 = vmatpush1.bf16.msra.mxu0 %v1650
        %1673 = vmatprep.subr.bf16.mxu0 0
        %1674 = vmatpush1.bf16.msra.mxu0 %v1649
        %1675 = vmatprep.subr.bf16.mxu0 0
        %1676 = vmatpush1.bf16.msra.mxu0 %v1648
        %1677 = vmatprep.subr.bf16.mxu0 0
        %1678 = vmatpush1.bf16.msra.mxu0 %v1647
        %1679 = vmatprep.subr.bf16.mxu0 0
        %1680 = vmatpush2.bf16.msra.mxu0 0
        %1681 = vmatprep.subr.bf16.mxu0 0
        %1682 = vmatpush2.bf16.msra.mxu0 0
        %1683 = vmatprep.subr.bf16.mxu0 0
        %1684 = vmatpush2.bf16.msra.mxu0 0
        %1685 = vmatprep.subr.bf16.mxu0 0
        %1686 = vmatpush2.bf16.msra.mxu0 0
        %1687 = vmatprep.subr.bf16.mxu0 0
        %1688 = vmatpush2.bf16.msra.mxu0 0
        %1689 = vmatprep.subr.bf16.mxu0 0
        %1690 = vmatpush2.bf16.msra.mxu0 0
        %1691 = vmatprep.subr.bf16.mxu0 0
        %1692 = vmatpush2.bf16.msra.mxu0 0
        %1693 = vmatprep.subr.bf16.mxu0 0
        %1694 = vmatpush2.bf16.msra.mxu0 0
        %1695 = vmatprep.mubr.bf16.mxu0 0
        %1696 = vmatmul.mubr.bf16.gmra.mxu0 %v350
        %v1697 = vpop.f32.mrf.mxu0
        %v1698 = vadd.f32 0.0, %v1697
        %v1699 = vpop.f32.mrf.mxu0
        %v1700 = vpop.f32.mrf.mxu0
        %v1701 = vadd.f32 0.0, %v1700
        %v1702 = vpop.f32.mrf.mxu0
        %1703 = vmatprep.mubr.bf16.mxu0 0
        %1704 = vmatmul.mubr.bf16.gmra.mxu0 %v362
        %v1705 = vpop.f32.mrf.mxu0
        %v1706 = vadd.f32 0.0, %v1705
        %v1707 = vpop.f32.mrf.mxu0
        %v1708 = vpop.f32.mrf.mxu0
        %v1709 = vadd.f32 0.0, %v1708
        %v1710 = vpop.f32.mrf.mxu0
        %1711 = vmatprep.mubr.bf16.mxu0 0
        %1712 = vmatmul.mubr.bf16.gmra.mxu0 %v374
        %v1713 = vpop.f32.mrf.mxu0
        %v1714 = vadd.f32 0.0, %v1713
        %v1715 = vpop.f32.mrf.mxu0
        %v1716 = vpop.f32.mrf.mxu0
        %v1717 = vadd.f32 0.0, %v1716
        %v1718 = vpop.f32.mrf.mxu0
        %1719 = vmatprep.mubr.bf16.mxu0 0
        %1720 = vmatmul.mubr.bf16.gmra.mxu0 %v386
        %v1721 = vpop.f32.mrf.mxu0
        %v1722 = vadd.f32 0.0, %v1721
        %v1723 = vpop.f32.mrf.mxu0
        %v1724 = vpop.f32.mrf.mxu0
        %v1725 = vadd.f32 0.0, %v1724
        %v1726 = vpop.f32.mrf.mxu0
        %1727 = vmatprep.mubr.bf16.mxu0 0
        %1728 = vmatmul.mubr.bf16.gmra.mxu0 %v398
        %v1729 = vpop.f32.mrf.mxu0
        %v1730 = vadd.f32 0.0, %v1729
        %v1731 = vpop.f32.mrf.mxu0
        %v1732 = vpop.f32.mrf.mxu0
        %v1733 = vadd.f32 0.0, %v1732
        %v1734 = vpop.f32.mrf.mxu0
        %1735 = vmatprep.mubr.bf16.mxu0 0
        %1736 = vmatmul.mubr.bf16.gmra.mxu0 %v410
        %v1737 = vpop.f32.mrf.mxu0
        %v1738 = vadd.f32 0.0, %v1737
        %v1739 = vpop.f32.mrf.mxu0
        %v1740 = vpop.f32.mrf.mxu0
        %v1741 = vadd.f32 0.0, %v1740
        %v1742 = vpop.f32.mrf.mxu0
        %1743 = vmatprep.mubr.bf16.mxu0 0
        %1744 = vmatmul.mubr.bf16.gmra.mxu0 %v422
        %v1745 = vpop.f32.mrf.mxu0
        %v1746 = vadd.f32 0.0, %v1745
        %v1747 = vpop.f32.mrf.mxu0
        %v1748 = vpop.f32.mrf.mxu0
        %v1749 = vadd.f32 0.0, %v1748
        %v1750 = vpop.f32.mrf.mxu0
        %1751 = vmatprep.mubr.bf16.mxu0 0
        %1752 = vmatmul.mubr.bf16.gmra.mxu0 %v434
        %v1753 = vpop.f32.mrf.mxu0
        %v1754 = vadd.f32 0.0, %v1753
        %v1755 = vpop.f32.mrf.mxu0
        %v1756 = vpop.f32.mrf.mxu0
        %v1757 = vadd.f32 0.0, %v1756
        %v1758 = vpop.f32.mrf.mxu0
        %1759 = vmatprep.mubr.bf16.mxu0 0
        %1760 = vmatmul.mubr.bf16.gmra.mxu0 %v446
        %v1761 = vpop.f32.mrf.mxu0
        %v1762 = vadd.f32 0.0, %v1761
        %v1763 = vpop.f32.mrf.mxu0
        %v1764 = vpop.f32.mrf.mxu0
        %v1765 = vadd.f32 0.0, %v1764
        %v1766 = vpop.f32.mrf.mxu0
        %1767 = vmatprep.mubr.bf16.mxu0 0
        %1768 = vmatmul.mubr.bf16.gmra.mxu0 %v458
        %v1769 = vpop.f32.mrf.mxu0
        %v1770 = vadd.f32 0.0, %v1769
        %v1771 = vpop.f32.mrf.mxu0
        %v1772 = vpop.f32.mrf.mxu0
        %v1773 = vadd.f32 0.0, %v1772
        %v1774 = vpop.f32.mrf.mxu0
        %1775 = vmatprep.mubr.bf16.mxu0 0
        %1776 = vmatmul.mubr.bf16.gmra.mxu0 %v470
        %v1777 = vpop.f32.mrf.mxu0
        %v1778 = vadd.f32 0.0, %v1777
        %v1779 = vpop.f32.mrf.mxu0
        %v1780 = vpop.f32.mrf.mxu0
        %v1781 = vadd.f32 0.0, %v1780
        %v1782 = vpop.f32.mrf.mxu0
        %1783 = vmatprep.mubr.bf16.mxu0 0
        %1784 = vmatmul.mubr.bf16.gmra.mxu0 %v482
        %v1785 = vpop.f32.mrf.mxu0
        %v1786 = vadd.f32 0.0, %v1785
        %v1787 = vpop.f32.mrf.mxu0
        %v1788 = vpop.f32.mrf.mxu0
        %v1789 = vadd.f32 0.0, %v1788
        %v1790 = vpop.f32.mrf.mxu0
        %1791 = vmatprep.mubr.bf16.mxu0 0
        %1792 = vmatmul.mubr.bf16.gmra.mxu0 %v494
        %v1793 = vpop.f32.mrf.mxu0
        %v1794 = vadd.f32 0.0, %v1793
        %v1795 = vpop.f32.mrf.mxu0
        %v1796 = vpop.f32.mrf.mxu0
        %v1797 = vadd.f32 0.0, %v1796
        %v1798 = vpop.f32.mrf.mxu0
        %1799 = vmatprep.mubr.bf16.mxu0 0
        %1800 = vmatmul.mubr.bf16.gmra.mxu0 %v506
        %v1801 = vpop.f32.mrf.mxu0
        %v1802 = vadd.f32 0.0, %v1801
        %v1803 = vpop.f32.mrf.mxu0
        %v1804 = vpop.f32.mrf.mxu0
        %v1805 = vadd.f32 0.0, %v1804
        %v1806 = vpop.f32.mrf.mxu0
        %1807 = vmatprep.mubr.bf16.mxu0 0
        %1808 = vmatmul.mubr.bf16.gmra.mxu0 %v518
        %v1809 = vpop.f32.mrf.mxu0
        %v1810 = vadd.f32 0.0, %v1809
        %v1811 = vpop.f32.mrf.mxu0
        %v1812 = vpop.f32.mrf.mxu0
        %v1813 = vadd.f32 0.0, %v1812
        %v1814 = vpop.f32.mrf.mxu0
        %1815 = vmatprep.mubr.bf16.mxu0 0
        %1816 = vmatmul.mubr.bf16.gmra.mxu0 %v1596
        %v1817 = vpop.f32.mrf.mxu0
        %v1818 = vadd.f32 0.0, %v1817
        %v1819 = vpop.f32.mrf.mxu0
        %v1820 = vpop.f32.mrf.mxu0
        %v1821 = vadd.f32 0.0, %v1820
        %v1822 = vpop.f32.mrf.mxu0
        %1823 = vdwg.mxu0
        %v1824 = vadd.f32 %v1552, %v1698
        %v1825 = vadd.f32 %v1553, %v1701
        %v1826 = vadd.f32 %v1554, %v1706
        %v1827 = vadd.f32 %v1555, %v1709
        %v1828 = vadd.f32 %v1556, %v1714
        %v1829 = vadd.f32 %v1557, %v1717
        %v1830 = vadd.f32 %v1558, %v1722
        %v1831 = vadd.f32 %v1559, %v1725
        %v1832 = vadd.f32 %v1560, %v1730
        %v1833 = vadd.f32 %v1561, %v1733
        %v1834 = vadd.f32 %v1562, %v1738
        %v1835 = vadd.f32 %v1563, %v1741
        %v1836 = vadd.f32 %v1564, %v1746
        %v1837 = vadd.f32 %v1565, %v1749
        %v1838 = vadd.f32 %v1566, %v1754
        %v1839 = vadd.f32 %v1567, %v1757
        %v1840 = vadd.f32 %v1568, %v1762
        %v1841 = vadd.f32 %v1569, %v1765
        %v1842 = vadd.f32 %v1570, %v1770
        %v1843 = vadd.f32 %v1571, %v1773
        %v1844 = vadd.f32 %v1572, %v1778
        %v1845 = vadd.f32 %v1573, %v1781
        %v1846 = vadd.f32 %v1574, %v1786
        %v1847 = vadd.f32 %v1575, %v1789
        %v1848 = vadd.f32 %v1576, %v1794
        %v1849 = vadd.f32 %v1577, %v1797
        %v1850 = vadd.f32 %v1578, %v1802
        %v1851 = vadd.f32 %v1579, %v1805
        %v1852 = vadd.f32 %v1580, %v1810
        %v1853 = vadd.f32 %v1581, %v1813
        %v1854 = vadd.f32 %v1582, %v1818
        %v1855 = vadd.f32 %v1583, %v1821
        %v1858 = vrot.slane %v1325, 1
        %v1859 = vrot.slane %v1584, 1
        %v1860 = vsel %vm1002, %v1858, %v1859
        %s1862 = scalar_lea.vmem %s1, 320
        %v1863 = vld [vmem:[%s1862] sm:$0xf]
        %v1864 = vld [vmem:[%s1862 + $0x4] sm:$0xf]
        %v1865 = vld [vmem:[%s1862 + $0x8] sm:$0xf]
        %v1866 = vld [vmem:[%s1862 + $0xc] sm:$0xf]
        %v1867 = vld [vmem:[%s1862 + $0x10] sm:$0xf]
        %v1868 = vld [vmem:[%s1862 + $0x14] sm:$0xf]
        %v1869 = vld [vmem:[%s1862 + $0x18] sm:$0xf]
        %v1870 = vld [vmem:[%s1862 + $0x1c] sm:$0xf]
        %v1871 = vld [vmem:[%s1862 + $0x20] sm:$0xf]
        %v1872 = vld [vmem:[%s1862 + $0x24] sm:$0xf]
        %v1873 = vld [vmem:[%s1862 + $0x28] sm:$0xf]
        %v1874 = vld [vmem:[%s1862 + $0x2c] sm:$0xf]
        %v1875 = vld [vmem:[%s1862 + $0x30] sm:$0xf]
        %v1876 = vld [vmem:[%s1862 + $0x34] sm:$0xf]
        %v1877 = vld [vmem:[%s1862 + $0x38] sm:$0xf]
        %v1878 = vld [vmem:[%s1862 + $0x3c] sm:$0xf]
        %v1895 = vunpack.c.l.b16 %v1863
        %v1896 = vunpack.c.l.b16 %v1864
        %v1897 = vunpack.c.l.b16 %v1865
        %v1898 = vunpack.c.l.b16 %v1866
        %v1899 = vunpack.c.l.b16 %v1867
        %v1900 = vunpack.c.l.b16 %v1868
        %v1901 = vunpack.c.l.b16 %v1869
        %v1902 = vunpack.c.l.b16 %v1870
        %v1903 = vunpack.c.l.b16 %v1871
        %v1904 = vunpack.c.l.b16 %v1872
        %v1905 = vunpack.c.l.b16 %v1873
        %v1906 = vunpack.c.l.b16 %v1874
        %v1907 = vunpack.c.l.b16 %v1875
        %v1908 = vunpack.c.l.b16 %v1876
        %v1909 = vunpack.c.l.b16 %v1877
        %v1910 = vunpack.c.l.b16 %v1878
        %v1911 = vpack.c.b16 %v1896, %v1895
        %v1912 = vpack.c.b16 %v1898, %v1897
        %v1913 = vpack.c.b16 %v1900, %v1899
        %v1914 = vpack.c.b16 %v1902, %v1901
        %v1915 = vpack.c.b16 %v1904, %v1903
        %v1916 = vpack.c.b16 %v1906, %v1905
        %v1917 = vpack.c.b16 %v1908, %v1907
        %v1918 = vpack.c.b16 %v1910, %v1909
        %1927 = vmatprep.subr.bf16.mxu0 0
        %1928 = vmatpush1.bf16.msra.mxu0 %v1918
        %1929 = vmatprep.subr.bf16.mxu0 0
        %1930 = vmatpush1.bf16.msra.mxu0 %v1917
        %1931 = vmatprep.subr.bf16.mxu0 0
        %1932 = vmatpush1.bf16.msra.mxu0 %v1916
        %1933 = vmatprep.subr.bf16.mxu0 0
        %1934 = vmatpush1.bf16.msra.mxu0 %v1915
        %1935 = vmatprep.subr.bf16.mxu0 0
        %1936 = vmatpush1.bf16.msra.mxu0 %v1914
        %1937 = vmatprep.subr.bf16.mxu0 0
        %1938 = vmatpush1.bf16.msra.mxu0 %v1913
        %1939 = vmatprep.subr.bf16.mxu0 0
        %1940 = vmatpush1.bf16.msra.mxu0 %v1912
        %1941 = vmatprep.subr.bf16.mxu0 0
        %1942 = vmatpush1.bf16.msra.mxu0 %v1911
        %1943 = vmatprep.subr.bf16.mxu0 0
        %1944 = vmatpush2.bf16.msra.mxu0 0
        %1945 = vmatprep.subr.bf16.mxu0 0
        %1946 = vmatpush2.bf16.msra.mxu0 0
        %1947 = vmatprep.subr.bf16.mxu0 0
        %1948 = vmatpush2.bf16.msra.mxu0 0
        %1949 = vmatprep.subr.bf16.mxu0 0
        %1950 = vmatpush2.bf16.msra.mxu0 0
        %1951 = vmatprep.subr.bf16.mxu0 0
        %1952 = vmatpush2.bf16.msra.mxu0 0
        %1953 = vmatprep.subr.bf16.mxu0 0
        %1954 = vmatpush2.bf16.msra.mxu0 0
        %1955 = vmatprep.subr.bf16.mxu0 0
        %1956 = vmatpush2.bf16.msra.mxu0 0
        %1957 = vmatprep.subr.bf16.mxu0 0
        %1958 = vmatpush2.bf16.msra.mxu0 0
        %1959 = vmatprep.mubr.bf16.mxu0 0
        %1960 = vmatmul.mubr.bf16.gmra.mxu0 %v1008
        %v1961 = vpop.f32.mrf.mxu0
        %v1962 = vadd.f32 0.0, %v1961
        %v1963 = vpop.f32.mrf.mxu0
        %v1964 = vpop.f32.mrf.mxu0
        %v1965 = vadd.f32 0.0, %v1964
        %v1966 = vpop.f32.mrf.mxu0
        %1967 = vmatprep.mubr.bf16.mxu0 0
        %1968 = vmatmul.mubr.bf16.gmra.mxu0 %v1011
        %v1969 = vpop.f32.mrf.mxu0
        %v1970 = vadd.f32 0.0, %v1969
        %v1971 = vpop.f32.mrf.mxu0
        %v1972 = vpop.f32.mrf.mxu0
        %v1973 = vadd.f32 0.0, %v1972
        %v1974 = vpop.f32.mrf.mxu0
        %1975 = vmatprep.mubr.bf16.mxu0 0
        %1976 = vmatmul.mubr.bf16.gmra.mxu0 %v1014
        %v1977 = vpop.f32.mrf.mxu0
        %v1978 = vadd.f32 0.0, %v1977
        %v1979 = vpop.f32.mrf.mxu0
        %v1980 = vpop.f32.mrf.mxu0
        %v1981 = vadd.f32 0.0, %v1980
        %v1982 = vpop.f32.mrf.mxu0
        %1983 = vmatprep.mubr.bf16.mxu0 0
        %1984 = vmatmul.mubr.bf16.gmra.mxu0 %v1017
        %v1985 = vpop.f32.mrf.mxu0
        %v1986 = vadd.f32 0.0, %v1985
        %v1987 = vpop.f32.mrf.mxu0
        %v1988 = vpop.f32.mrf.mxu0
        %v1989 = vadd.f32 0.0, %v1988
        %v1990 = vpop.f32.mrf.mxu0
        %1991 = vmatprep.mubr.bf16.mxu0 0
        %1992 = vmatmul.mubr.bf16.gmra.mxu0 %v1020
        %v1993 = vpop.f32.mrf.mxu0
        %v1994 = vadd.f32 0.0, %v1993
        %v1995 = vpop.f32.mrf.mxu0
        %v1996 = vpop.f32.mrf.mxu0
        %v1997 = vadd.f32 0.0, %v1996
        %v1998 = vpop.f32.mrf.mxu0
        %1999 = vmatprep.mubr.bf16.mxu0 0
        %2000 = vmatmul.mubr.bf16.gmra.mxu0 %v1023
        %v2001 = vpop.f32.mrf.mxu0
        %v2002 = vadd.f32 0.0, %v2001
        %v2003 = vpop.f32.mrf.mxu0
        %v2004 = vpop.f32.mrf.mxu0
        %v2005 = vadd.f32 0.0, %v2004
        %v2006 = vpop.f32.mrf.mxu0
        %2007 = vmatprep.mubr.bf16.mxu0 0
        %2008 = vmatmul.mubr.bf16.gmra.mxu0 %v1026
        %v2009 = vpop.f32.mrf.mxu0
        %v2010 = vadd.f32 0.0, %v2009
        %v2011 = vpop.f32.mrf.mxu0
        %v2012 = vpop.f32.mrf.mxu0
        %v2013 = vadd.f32 0.0, %v2012
        %v2014 = vpop.f32.mrf.mxu0
        %2015 = vmatprep.mubr.bf16.mxu0 0
        %2016 = vmatmul.mubr.bf16.gmra.mxu0 %v1029
        %v2017 = vpop.f32.mrf.mxu0
        %v2018 = vadd.f32 0.0, %v2017
        %v2019 = vpop.f32.mrf.mxu0
        %v2020 = vpop.f32.mrf.mxu0
        %v2021 = vadd.f32 0.0, %v2020
        %v2022 = vpop.f32.mrf.mxu0
        %2023 = vmatprep.mubr.bf16.mxu0 0
        %2024 = vmatmul.mubr.bf16.gmra.mxu0 %v1032
        %v2025 = vpop.f32.mrf.mxu0
        %v2026 = vadd.f32 0.0, %v2025
        %v2027 = vpop.f32.mrf.mxu0
        %v2028 = vpop.f32.mrf.mxu0
        %v2029 = vadd.f32 0.0, %v2028
        %v2030 = vpop.f32.mrf.mxu0
        %2031 = vmatprep.mubr.bf16.mxu0 0
        %2032 = vmatmul.mubr.bf16.gmra.mxu0 %v1035
        %v2033 = vpop.f32.mrf.mxu0
        %v2034 = vadd.f32 0.0, %v2033
        %v2035 = vpop.f32.mrf.mxu0
        %v2036 = vpop.f32.mrf.mxu0
        %v2037 = vadd.f32 0.0, %v2036
        %v2038 = vpop.f32.mrf.mxu0
        %2039 = vmatprep.mubr.bf16.mxu0 0
        %2040 = vmatmul.mubr.bf16.gmra.mxu0 %v1038
        %v2041 = vpop.f32.mrf.mxu0
        %v2042 = vadd.f32 0.0, %v2041
        %v2043 = vpop.f32.mrf.mxu0
        %v2044 = vpop.f32.mrf.mxu0
        %v2045 = vadd.f32 0.0, %v2044
        %v2046 = vpop.f32.mrf.mxu0
        %2047 = vmatprep.mubr.bf16.mxu0 0
        %2048 = vmatmul.mubr.bf16.gmra.mxu0 %v1041
        %v2049 = vpop.f32.mrf.mxu0
        %v2050 = vadd.f32 0.0, %v2049
        %v2051 = vpop.f32.mrf.mxu0
        %v2052 = vpop.f32.mrf.mxu0
        %v2053 = vadd.f32 0.0, %v2052
        %v2054 = vpop.f32.mrf.mxu0
        %2055 = vmatprep.mubr.bf16.mxu0 0
        %2056 = vmatmul.mubr.bf16.gmra.mxu0 %v1044
        %v2057 = vpop.f32.mrf.mxu0
        %v2058 = vadd.f32 0.0, %v2057
        %v2059 = vpop.f32.mrf.mxu0
        %v2060 = vpop.f32.mrf.mxu0
        %v2061 = vadd.f32 0.0, %v2060
        %v2062 = vpop.f32.mrf.mxu0
        %2063 = vmatprep.mubr.bf16.mxu0 0
        %2064 = vmatmul.mubr.bf16.gmra.mxu0 %v1047
        %v2065 = vpop.f32.mrf.mxu0
        %v2066 = vadd.f32 0.0, %v2065
        %v2067 = vpop.f32.mrf.mxu0
        %v2068 = vpop.f32.mrf.mxu0
        %v2069 = vadd.f32 0.0, %v2068
        %v2070 = vpop.f32.mrf.mxu0
        %2071 = vmatprep.mubr.bf16.mxu0 0
        %2072 = vmatmul.mubr.bf16.gmra.mxu0 %v1050
        %v2073 = vpop.f32.mrf.mxu0
        %v2074 = vadd.f32 0.0, %v2073
        %v2075 = vpop.f32.mrf.mxu0
        %v2076 = vpop.f32.mrf.mxu0
        %v2077 = vadd.f32 0.0, %v2076
        %v2078 = vpop.f32.mrf.mxu0
        %2079 = vmatprep.mubr.bf16.mxu0 0
        %2080 = vmatmul.mubr.bf16.gmra.mxu0 %v1860
        %v2081 = vpop.f32.mrf.mxu0
        %v2082 = vadd.f32 0.0, %v2081
        %v2083 = vpop.f32.mrf.mxu0
        %v2084 = vpop.f32.mrf.mxu0
        %v2085 = vadd.f32 0.0, %v2084
        %v2086 = vpop.f32.mrf.mxu0
        %2087 = vdwg.mxu0
        %v2088 = vadd.f32 %v1824, %v1962
        %v2089 = vadd.f32 %v1825, %v1965
        %v2090 = vadd.f32 %v1826, %v1970
        %v2091 = vadd.f32 %v1827, %v1973
        %v2092 = vadd.f32 %v1828, %v1978
        %v2093 = vadd.f32 %v1829, %v1981
        %v2094 = vadd.f32 %v1830, %v1986
        %v2095 = vadd.f32 %v1831, %v1989
        %v2096 = vadd.f32 %v1832, %v1994
        %v2097 = vadd.f32 %v1833, %v1997
        %v2098 = vadd.f32 %v1834, %v2002
        %v2099 = vadd.f32 %v1835, %v2005
        %v2100 = vadd.f32 %v1836, %v2010
        %v2101 = vadd.f32 %v1837, %v2013
        %v2102 = vadd.f32 %v1838, %v2018
        %v2103 = vadd.f32 %v1839, %v2021
        %v2104 = vadd.f32 %v1840, %v2026
        %v2105 = vadd.f32 %v1841, %v2029
        %v2106 = vadd.f32 %v1842, %v2034
        %v2107 = vadd.f32 %v1843, %v2037
        %v2108 = vadd.f32 %v1844, %v2042
        %v2109 = vadd.f32 %v1845, %v2045
        %v2110 = vadd.f32 %v1846, %v2050
        %v2111 = vadd.f32 %v1847, %v2053
        %v2112 = vadd.f32 %v1848, %v2058
        %v2113 = vadd.f32 %v1849, %v2061
        %v2114 = vadd.f32 %v1850, %v2066
        %v2115 = vadd.f32 %v1851, %v2069
        %v2116 = vadd.f32 %v1852, %v2074
        %v2117 = vadd.f32 %v1853, %v2077
        %v2118 = vadd.f32 %v1854, %v2082
        %v2119 = vadd.f32 %v1855, %v2085
        %v2120 = vpack.c.bf16 %v276, %v275
        %s2121 = scalar_lea.vmem %s1, 384
        %v2122 = vld [vmem:[%s2121] sm:$0xf]
        %v2123 = vld [vmem:[%s2121 + $0x4] sm:$0xf]
        %v2124 = vld [vmem:[%s2121 + $0x8] sm:$0xf]
        %v2125 = vld [vmem:[%s2121 + $0xc] sm:$0xf]
        %v2126 = vld [vmem:[%s2121 + $0x10] sm:$0xf]
        %v2127 = vld [vmem:[%s2121 + $0x14] sm:$0xf]
        %v2128 = vld [vmem:[%s2121 + $0x18] sm:$0xf]
        %v2129 = vld [vmem:[%s2121 + $0x1c] sm:$0xf]
        %v2130 = vld [vmem:[%s2121 + $0x20] sm:$0xf]
        %v2131 = vld [vmem:[%s2121 + $0x24] sm:$0xf]
        %v2132 = vld [vmem:[%s2121 + $0x28] sm:$0xf]
        %v2133 = vld [vmem:[%s2121 + $0x2c] sm:$0xf]
        %v2134 = vld [vmem:[%s2121 + $0x30] sm:$0xf]
        %v2135 = vld [vmem:[%s2121 + $0x34] sm:$0xf]
        %v2136 = vld [vmem:[%s2121 + $0x38] sm:$0xf]
        %v2137 = vld [vmem:[%s2121 + $0x3c] sm:$0xf]
        %v2154 = vunpack.c.l.b16 %v2122
        %v2155 = vunpack.c.l.b16 %v2123
        %v2156 = vunpack.c.l.b16 %v2124
        %v2157 = vunpack.c.l.b16 %v2125
        %v2158 = vunpack.c.l.b16 %v2126
        %v2159 = vunpack.c.l.b16 %v2127
        %v2160 = vunpack.c.l.b16 %v2128
        %v2161 = vunpack.c.l.b16 %v2129
        %v2162 = vunpack.c.l.b16 %v2130
        %v2163 = vunpack.c.l.b16 %v2131
        %v2164 = vunpack.c.l.b16 %v2132
        %v2165 = vunpack.c.l.b16 %v2133
        %v2166 = vunpack.c.l.b16 %v2134
        %v2167 = vunpack.c.l.b16 %v2135
        %v2168 = vunpack.c.l.b16 %v2136
        %v2169 = vunpack.c.l.b16 %v2137
        %v2170 = vpack.c.b16 %v2155, %v2154
        %v2171 = vpack.c.b16 %v2157, %v2156
        %v2172 = vpack.c.b16 %v2159, %v2158
        %v2173 = vpack.c.b16 %v2161, %v2160
        %v2174 = vpack.c.b16 %v2163, %v2162
        %v2175 = vpack.c.b16 %v2165, %v2164
        %v2176 = vpack.c.b16 %v2167, %v2166
        %v2177 = vpack.c.b16 %v2169, %v2168
        %2186 = vmatprep.subr.bf16.mxu0 0
        %2187 = vmatpush1.bf16.msra.mxu0 %v2177
        %2188 = vmatprep.subr.bf16.mxu0 0
        %2189 = vmatpush1.bf16.msra.mxu0 %v2176
        %2190 = vmatprep.subr.bf16.mxu0 0
        %2191 = vmatpush1.bf16.msra.mxu0 %v2175
        %2192 = vmatprep.subr.bf16.mxu0 0
        %2193 = vmatpush1.bf16.msra.mxu0 %v2174
        %2194 = vmatprep.subr.bf16.mxu0 0
        %2195 = vmatpush1.bf16.msra.mxu0 %v2173
        %2196 = vmatprep.subr.bf16.mxu0 0
        %2197 = vmatpush1.bf16.msra.mxu0 %v2172
        %2198 = vmatprep.subr.bf16.mxu0 0
        %2199 = vmatpush1.bf16.msra.mxu0 %v2171
        %2200 = vmatprep.subr.bf16.mxu0 0
        %2201 = vmatpush1.bf16.msra.mxu0 %v2170
        %2202 = vmatprep.subr.bf16.mxu0 0
        %2203 = vmatpush2.bf16.msra.mxu0 0
        %2204 = vmatprep.subr.bf16.mxu0 0
        %2205 = vmatpush2.bf16.msra.mxu0 0
        %2206 = vmatprep.subr.bf16.mxu0 0
        %2207 = vmatpush2.bf16.msra.mxu0 0
        %2208 = vmatprep.subr.bf16.mxu0 0
        %2209 = vmatpush2.bf16.msra.mxu0 0
        %2210 = vmatprep.subr.bf16.mxu0 0
        %2211 = vmatpush2.bf16.msra.mxu0 0
        %2212 = vmatprep.subr.bf16.mxu0 0
        %2213 = vmatpush2.bf16.msra.mxu0 0
        %2214 = vmatprep.subr.bf16.mxu0 0
        %2215 = vmatpush2.bf16.msra.mxu0 0
        %2216 = vmatprep.subr.bf16.mxu0 0
        %2217 = vmatpush2.bf16.msra.mxu0 0
        %2218 = vmatprep.mubr.bf16.mxu0 0
        %2219 = vmatmul.mubr.bf16.gmra.mxu0 %v280
        %v2220 = vpop.f32.mrf.mxu0
        %v2221 = vadd.f32 0.0, %v2220
        %v2222 = vpop.f32.mrf.mxu0
        %v2223 = vpop.f32.mrf.mxu0
        %v2224 = vadd.f32 0.0, %v2223
        %v2225 = vpop.f32.mrf.mxu0
        %2226 = vmatprep.mubr.bf16.mxu0 0
        %2227 = vmatmul.mubr.bf16.gmra.mxu0 %v281
        %v2228 = vpop.f32.mrf.mxu0
        %v2229 = vadd.f32 0.0, %v2228
        %v2230 = vpop.f32.mrf.mxu0
        %v2231 = vpop.f32.mrf.mxu0
        %v2232 = vadd.f32 0.0, %v2231
        %v2233 = vpop.f32.mrf.mxu0
        %2234 = vmatprep.mubr.bf16.mxu0 0
        %2235 = vmatmul.mubr.bf16.gmra.mxu0 %v282
        %v2236 = vpop.f32.mrf.mxu0
        %v2237 = vadd.f32 0.0, %v2236
        %v2238 = vpop.f32.mrf.mxu0
        %v2239 = vpop.f32.mrf.mxu0
        %v2240 = vadd.f32 0.0, %v2239
        %v2241 = vpop.f32.mrf.mxu0
        %2242 = vmatprep.mubr.bf16.mxu0 0
        %2243 = vmatmul.mubr.bf16.gmra.mxu0 %v283
        %v2244 = vpop.f32.mrf.mxu0
        %v2245 = vadd.f32 0.0, %v2244
        %v2246 = vpop.f32.mrf.mxu0
        %v2247 = vpop.f32.mrf.mxu0
        %v2248 = vadd.f32 0.0, %v2247
        %v2249 = vpop.f32.mrf.mxu0
        %2250 = vmatprep.mubr.bf16.mxu0 0
        %2251 = vmatmul.mubr.bf16.gmra.mxu0 %v284
        %v2252 = vpop.f32.mrf.mxu0
        %v2253 = vadd.f32 0.0, %v2252
        %v2254 = vpop.f32.mrf.mxu0
        %v2255 = vpop.f32.mrf.mxu0
        %v2256 = vadd.f32 0.0, %v2255
        %v2257 = vpop.f32.mrf.mxu0
        %2258 = vmatprep.mubr.bf16.mxu0 0
        %2259 = vmatmul.mubr.bf16.gmra.mxu0 %v285
        %v2260 = vpop.f32.mrf.mxu0
        %v2261 = vadd.f32 0.0, %v2260
        %v2262 = vpop.f32.mrf.mxu0
        %v2263 = vpop.f32.mrf.mxu0
        %v2264 = vadd.f32 0.0, %v2263
        %v2265 = vpop.f32.mrf.mxu0
        %2266 = vmatprep.mubr.bf16.mxu0 0
        %2267 = vmatmul.mubr.bf16.gmra.mxu0 %v286
        %v2268 = vpop.f32.mrf.mxu0
        %v2269 = vadd.f32 0.0, %v2268
        %v2270 = vpop.f32.mrf.mxu0
        %v2271 = vpop.f32.mrf.mxu0
        %v2272 = vadd.f32 0.0, %v2271
        %v2273 = vpop.f32.mrf.mxu0
        %2274 = vmatprep.mubr.bf16.mxu0 0
        %2275 = vmatmul.mubr.bf16.gmra.mxu0 %v287
        %v2276 = vpop.f32.mrf.mxu0
        %v2277 = vadd.f32 0.0, %v2276
        %v2278 = vpop.f32.mrf.mxu0
        %v2279 = vpop.f32.mrf.mxu0
        %v2280 = vadd.f32 0.0, %v2279
        %v2281 = vpop.f32.mrf.mxu0
        %2282 = vmatprep.mubr.bf16.mxu0 0
        %2283 = vmatmul.mubr.bf16.gmra.mxu0 %v288
        %v2284 = vpop.f32.mrf.mxu0
        %v2285 = vadd.f32 0.0, %v2284
        %v2286 = vpop.f32.mrf.mxu0
        %v2287 = vpop.f32.mrf.mxu0
        %v2288 = vadd.f32 0.0, %v2287
        %v2289 = vpop.f32.mrf.mxu0
        %2290 = vmatprep.mubr.bf16.mxu0 0
        %2291 = vmatmul.mubr.bf16.gmra.mxu0 %v289
        %v2292 = vpop.f32.mrf.mxu0
        %v2293 = vadd.f32 0.0, %v2292
        %v2294 = vpop.f32.mrf.mxu0
        %v2295 = vpop.f32.mrf.mxu0
        %v2296 = vadd.f32 0.0, %v2295
        %v2297 = vpop.f32.mrf.mxu0
        %2298 = vmatprep.mubr.bf16.mxu0 0
        %2299 = vmatmul.mubr.bf16.gmra.mxu0 %v290
        %v2300 = vpop.f32.mrf.mxu0
        %v2301 = vadd.f32 0.0, %v2300
        %v2302 = vpop.f32.mrf.mxu0
        %v2303 = vpop.f32.mrf.mxu0
        %v2304 = vadd.f32 0.0, %v2303
        %v2305 = vpop.f32.mrf.mxu0
        %2306 = vmatprep.mubr.bf16.mxu0 0
        %2307 = vmatmul.mubr.bf16.gmra.mxu0 %v291
        %v2308 = vpop.f32.mrf.mxu0
        %v2309 = vadd.f32 0.0, %v2308
        %v2310 = vpop.f32.mrf.mxu0
        %v2311 = vpop.f32.mrf.mxu0
        %v2312 = vadd.f32 0.0, %v2311
        %v2313 = vpop.f32.mrf.mxu0
        %2314 = vmatprep.mubr.bf16.mxu0 0
        %2315 = vmatmul.mubr.bf16.gmra.mxu0 %v292
        %v2316 = vpop.f32.mrf.mxu0
        %v2317 = vadd.f32 0.0, %v2316
        %v2318 = vpop.f32.mrf.mxu0
        %v2319 = vpop.f32.mrf.mxu0
        %v2320 = vadd.f32 0.0, %v2319
        %v2321 = vpop.f32.mrf.mxu0
        %2322 = vmatprep.mubr.bf16.mxu0 0
        %2323 = vmatmul.mubr.bf16.gmra.mxu0 %v293
        %v2324 = vpop.f32.mrf.mxu0
        %v2325 = vadd.f32 0.0, %v2324
        %v2326 = vpop.f32.mrf.mxu0
        %v2327 = vpop.f32.mrf.mxu0
        %v2328 = vadd.f32 0.0, %v2327
        %v2329 = vpop.f32.mrf.mxu0
        %2330 = vmatprep.mubr.bf16.mxu0 0
        %2331 = vmatmul.mubr.bf16.gmra.mxu0 %v1325
        %v2332 = vpop.f32.mrf.mxu0
        %v2333 = vadd.f32 0.0, %v2332
        %v2334 = vpop.f32.mrf.mxu0
        %v2335 = vpop.f32.mrf.mxu0
        %v2336 = vadd.f32 0.0, %v2335
        %v2337 = vpop.f32.mrf.mxu0
        %2338 = vmatprep.mubr.bf16.mxu0 0
        %2339 = vmatmul.mubr.bf16.gmra.mxu0 %v2120
        %v2340 = vpop.f32.mrf.mxu0
        %v2341 = vadd.f32 0.0, %v2340
        %v2342 = vpop.f32.mrf.mxu0
        %v2343 = vpop.f32.mrf.mxu0
        %v2344 = vadd.f32 0.0, %v2343
        %v2345 = vpop.f32.mrf.mxu0
        %2346 = vdwg.mxu0
        %v2347 = vadd.f32 %v2088, %v2221
        %v2348 = vadd.f32 %v2089, %v2224
        %v2349 = vadd.f32 %v2090, %v2229
        %v2350 = vadd.f32 %v2091, %v2232
        %v2351 = vadd.f32 %v2092, %v2237
        %v2352 = vadd.f32 %v2093, %v2240
        %v2353 = vadd.f32 %v2094, %v2245
        %v2354 = vadd.f32 %v2095, %v2248
        %v2355 = vadd.f32 %v2096, %v2253
        %v2356 = vadd.f32 %v2097, %v2256
        %v2357 = vadd.f32 %v2098, %v2261
        %v2358 = vadd.f32 %v2099, %v2264
        %v2359 = vadd.f32 %v2100, %v2269
        %v2360 = vadd.f32 %v2101, %v2272
        %v2361 = vadd.f32 %v2102, %v2277
        %v2362 = vadd.f32 %v2103, %v2280
        %v2363 = vadd.f32 %v2104, %v2285
        %v2364 = vadd.f32 %v2105, %v2288
        %v2365 = vadd.f32 %v2106, %v2293
        %v2366 = vadd.f32 %v2107, %v2296
        %v2367 = vadd.f32 %v2108, %v2301
        %v2368 = vadd.f32 %v2109, %v2304
        %v2369 = vadd.f32 %v2110, %v2309
        %v2370 = vadd.f32 %v2111, %v2312
        %v2371 = vadd.f32 %v2112, %v2317
        %v2372 = vadd.f32 %v2113, %v2320
        %v2373 = vadd.f32 %v2114, %v2325
        %v2374 = vadd.f32 %v2115, %v2328
        %v2375 = vadd.f32 %v2116, %v2333
        %v2376 = vadd.f32 %v2117, %v2336
        %v2377 = vadd.f32 %v2118, %v2341
        %v2378 = vadd.f32 %v2119, %v2344
        %v2379 = vpack.c.bf16 %v277, %v277
        %v2381 = vshrl.u32 %v2120, 16
        %v2383 = vshll.u32 %v2120, 16
        %v2385 = vrot.slane %v2383, 1
        %v2386 = vor.u32 %v2381, %v2385
        %v2388 = vshll.u32 %v2379, 16
        %v2390 = vrot.slane %v2388, 1
        %v2391 = vsel %vm326, %v2386, %v2390
        %s2393 = scalar_lea.vmem %s1, 448
        %v2394 = vld [vmem:[%s2393] sm:$0xf]
        %v2395 = vld [vmem:[%s2393 + $0x4] sm:$0xf]
        %v2396 = vld [vmem:[%s2393 + $0x8] sm:$0xf]
        %v2397 = vld [vmem:[%s2393 + $0xc] sm:$0xf]
        %v2398 = vld [vmem:[%s2393 + $0x10] sm:$0xf]
        %v2399 = vld [vmem:[%s2393 + $0x14] sm:$0xf]
        %v2400 = vld [vmem:[%s2393 + $0x18] sm:$0xf]
        %v2401 = vld [vmem:[%s2393 + $0x1c] sm:$0xf]
        %v2402 = vld [vmem:[%s2393 + $0x20] sm:$0xf]
        %v2403 = vld [vmem:[%s2393 + $0x24] sm:$0xf]
        %v2404 = vld [vmem:[%s2393 + $0x28] sm:$0xf]
        %v2405 = vld [vmem:[%s2393 + $0x2c] sm:$0xf]
        %v2406 = vld [vmem:[%s2393 + $0x30] sm:$0xf]
        %v2407 = vld [vmem:[%s2393 + $0x34] sm:$0xf]
        %v2408 = vld [vmem:[%s2393 + $0x38] sm:$0xf]
        %v2409 = vld [vmem:[%s2393 + $0x3c] sm:$0xf]
        %v2426 = vunpack.c.l.b16 %v2394
        %v2427 = vunpack.c.l.b16 %v2395
        %v2428 = vunpack.c.l.b16 %v2396
        %v2429 = vunpack.c.l.b16 %v2397
        %v2430 = vunpack.c.l.b16 %v2398
        %v2431 = vunpack.c.l.b16 %v2399
        %v2432 = vunpack.c.l.b16 %v2400
        %v2433 = vunpack.c.l.b16 %v2401
        %v2434 = vunpack.c.l.b16 %v2402
        %v2435 = vunpack.c.l.b16 %v2403
        %v2436 = vunpack.c.l.b16 %v2404
        %v2437 = vunpack.c.l.b16 %v2405
        %v2438 = vunpack.c.l.b16 %v2406
        %v2439 = vunpack.c.l.b16 %v2407
        %v2440 = vunpack.c.l.b16 %v2408
        %v2441 = vunpack.c.l.b16 %v2409
        %v2442 = vpack.c.b16 %v2427, %v2426
        %v2443 = vpack.c.b16 %v2429, %v2428
        %v2444 = vpack.c.b16 %v2431, %v2430
        %v2445 = vpack.c.b16 %v2433, %v2432
        %v2446 = vpack.c.b16 %v2435, %v2434
        %v2447 = vpack.c.b16 %v2437, %v2436
        %v2448 = vpack.c.b16 %v2439, %v2438
        %v2449 = vpack.c.b16 %v2441, %v2440
        %2458 = vmatprep.subr.bf16.mxu0 0
        %2459 = vmatpush1.bf16.msra.mxu0 %v2449
        %2460 = vmatprep.subr.bf16.mxu0 0
        %2461 = vmatpush1.bf16.msra.mxu0 %v2448
        %2462 = vmatprep.subr.bf16.mxu0 0
        %2463 = vmatpush1.bf16.msra.mxu0 %v2447
        %2464 = vmatprep.subr.bf16.mxu0 0
        %2465 = vmatpush1.bf16.msra.mxu0 %v2446
        %2466 = vmatprep.subr.bf16.mxu0 0
        %2467 = vmatpush1.bf16.msra.mxu0 %v2445
        %2468 = vmatprep.subr.bf16.mxu0 0
        %2469 = vmatpush1.bf16.msra.mxu0 %v2444
        %2470 = vmatprep.subr.bf16.mxu0 0
        %2471 = vmatpush1.bf16.msra.mxu0 %v2443
        %2472 = vmatprep.subr.bf16.mxu0 0
        %2473 = vmatpush1.bf16.msra.mxu0 %v2442
        %2474 = vmatprep.subr.bf16.mxu0 0
        %2475 = vmatpush2.bf16.msra.mxu0 0
        %2476 = vmatprep.subr.bf16.mxu0 0
        %2477 = vmatpush2.bf16.msra.mxu0 0
        %2478 = vmatprep.subr.bf16.mxu0 0
        %2479 = vmatpush2.bf16.msra.mxu0 0
        %2480 = vmatprep.subr.bf16.mxu0 0
        %2481 = vmatpush2.bf16.msra.mxu0 0
        %2482 = vmatprep.subr.bf16.mxu0 0
        %2483 = vmatpush2.bf16.msra.mxu0 0
        %2484 = vmatprep.subr.bf16.mxu0 0
        %2485 = vmatpush2.bf16.msra.mxu0 0
        %2486 = vmatprep.subr.bf16.mxu0 0
        %2487 = vmatpush2.bf16.msra.mxu0 0
        %2488 = vmatprep.subr.bf16.mxu0 0
        %2489 = vmatpush2.bf16.msra.mxu0 0
        %2490 = vmatprep.mubr.bf16.mxu0 0
        %2491 = vmatmul.mubr.bf16.gmra.mxu0 %v362
        %v2492 = vpop.f32.mrf.mxu0
        %v2493 = vadd.f32 0.0, %v2492
        %v2494 = vpop.f32.mrf.mxu0
        %v2495 = vpop.f32.mrf.mxu0
        %v2496 = vadd.f32 0.0, %v2495
        %v2497 = vpop.f32.mrf.mxu0
        %2498 = vmatprep.mubr.bf16.mxu0 0
        %2499 = vmatmul.mubr.bf16.gmra.mxu0 %v374
        %v2500 = vpop.f32.mrf.mxu0
        %v2501 = vadd.f32 0.0, %v2500
        %v2502 = vpop.f32.mrf.mxu0
        %v2503 = vpop.f32.mrf.mxu0
        %v2504 = vadd.f32 0.0, %v2503
        %v2505 = vpop.f32.mrf.mxu0
        %2506 = vmatprep.mubr.bf16.mxu0 0
        %2507 = vmatmul.mubr.bf16.gmra.mxu0 %v386
        %v2508 = vpop.f32.mrf.mxu0
        %v2509 = vadd.f32 0.0, %v2508
        %v2510 = vpop.f32.mrf.mxu0
        %v2511 = vpop.f32.mrf.mxu0
        %v2512 = vadd.f32 0.0, %v2511
        %v2513 = vpop.f32.mrf.mxu0
        %2514 = vmatprep.mubr.bf16.mxu0 0
        %2515 = vmatmul.mubr.bf16.gmra.mxu0 %v398
        %v2516 = vpop.f32.mrf.mxu0
        %v2517 = vadd.f32 0.0, %v2516
        %v2518 = vpop.f32.mrf.mxu0
        %v2519 = vpop.f32.mrf.mxu0
        %v2520 = vadd.f32 0.0, %v2519
        %v2521 = vpop.f32.mrf.mxu0
        %2522 = vmatprep.mubr.bf16.mxu0 0
        %2523 = vmatmul.mubr.bf16.gmra.mxu0 %v410
        %v2524 = vpop.f32.mrf.mxu0
        %v2525 = vadd.f32 0.0, %v2524
        %v2526 = vpop.f32.mrf.mxu0
        %v2527 = vpop.f32.mrf.mxu0
        %v2528 = vadd.f32 0.0, %v2527
        %v2529 = vpop.f32.mrf.mxu0
        %2530 = vmatprep.mubr.bf16.mxu0 0
        %2531 = vmatmul.mubr.bf16.gmra.mxu0 %v422
        %v2532 = vpop.f32.mrf.mxu0
        %v2533 = vadd.f32 0.0, %v2532
        %v2534 = vpop.f32.mrf.mxu0
        %v2535 = vpop.f32.mrf.mxu0
        %v2536 = vadd.f32 0.0, %v2535
        %v2537 = vpop.f32.mrf.mxu0
        %2538 = vmatprep.mubr.bf16.mxu0 0
        %2539 = vmatmul.mubr.bf16.gmra.mxu0 %v434
        %v2540 = vpop.f32.mrf.mxu0
        %v2541 = vadd.f32 0.0, %v2540
        %v2542 = vpop.f32.mrf.mxu0
        %v2543 = vpop.f32.mrf.mxu0
        %v2544 = vadd.f32 0.0, %v2543
        %v2545 = vpop.f32.mrf.mxu0
        %2546 = vmatprep.mubr.bf16.mxu0 0
        %2547 = vmatmul.mubr.bf16.gmra.mxu0 %v446
        %v2548 = vpop.f32.mrf.mxu0
        %v2549 = vadd.f32 0.0, %v2548
        %v2550 = vpop.f32.mrf.mxu0
        %v2551 = vpop.f32.mrf.mxu0
        %v2552 = vadd.f32 0.0, %v2551
        %v2553 = vpop.f32.mrf.mxu0
        %2554 = vmatprep.mubr.bf16.mxu0 0
        %2555 = vmatmul.mubr.bf16.gmra.mxu0 %v458
        %v2556 = vpop.f32.mrf.mxu0
        %v2557 = vadd.f32 0.0, %v2556
        %v2558 = vpop.f32.mrf.mxu0
        %v2559 = vpop.f32.mrf.mxu0
        %v2560 = vadd.f32 0.0, %v2559
        %v2561 = vpop.f32.mrf.mxu0
        %2562 = vmatprep.mubr.bf16.mxu0 0
        %2563 = vmatmul.mubr.bf16.gmra.mxu0 %v470
        %v2564 = vpop.f32.mrf.mxu0
        %v2565 = vadd.f32 0.0, %v2564
        %v2566 = vpop.f32.mrf.mxu0
        %v2567 = vpop.f32.mrf.mxu0
        %v2568 = vadd.f32 0.0, %v2567
        %v2569 = vpop.f32.mrf.mxu0
        %2570 = vmatprep.mubr.bf16.mxu0 0
        %2571 = vmatmul.mubr.bf16.gmra.mxu0 %v482
        %v2572 = vpop.f32.mrf.mxu0
        %v2573 = vadd.f32 0.0, %v2572
        %v2574 = vpop.f32.mrf.mxu0
        %v2575 = vpop.f32.mrf.mxu0
        %v2576 = vadd.f32 0.0, %v2575
        %v2577 = vpop.f32.mrf.mxu0
        %2578 = vmatprep.mubr.bf16.mxu0 0
        %2579 = vmatmul.mubr.bf16.gmra.mxu0 %v494
        %v2580 = vpop.f32.mrf.mxu0
        %v2581 = vadd.f32 0.0, %v2580
        %v2582 = vpop.f32.mrf.mxu0
        %v2583 = vpop.f32.mrf.mxu0
        %v2584 = vadd.f32 0.0, %v2583
        %v2585 = vpop.f32.mrf.mxu0
        %2586 = vmatprep.mubr.bf16.mxu0 0
        %2587 = vmatmul.mubr.bf16.gmra.mxu0 %v506
        %v2588 = vpop.f32.mrf.mxu0
        %v2589 = vadd.f32 0.0, %v2588
        %v2590 = vpop.f32.mrf.mxu0
        %v2591 = vpop.f32.mrf.mxu0
        %v2592 = vadd.f32 0.0, %v2591
        %v2593 = vpop.f32.mrf.mxu0
        %2594 = vmatprep.mubr.bf16.mxu0 0
        %2595 = vmatmul.mubr.bf16.gmra.mxu0 %v518
        %v2596 = vpop.f32.mrf.mxu0
        %v2597 = vadd.f32 0.0, %v2596
        %v2598 = vpop.f32.mrf.mxu0
        %v2599 = vpop.f32.mrf.mxu0
        %v2600 = vadd.f32 0.0, %v2599
        %v2601 = vpop.f32.mrf.mxu0
        %2602 = vmatprep.mubr.bf16.mxu0 0
        %2603 = vmatmul.mubr.bf16.gmra.mxu0 %v1596
        %v2604 = vpop.f32.mrf.mxu0
        %v2605 = vadd.f32 0.0, %v2604
        %v2606 = vpop.f32.mrf.mxu0
        %v2607 = vpop.f32.mrf.mxu0
        %v2608 = vadd.f32 0.0, %v2607
        %v2609 = vpop.f32.mrf.mxu0
        %2610 = vmatprep.mubr.bf16.mxu0 0
        %2611 = vmatmul.mubr.bf16.gmra.mxu0 %v2391
        %v2612 = vpop.f32.mrf.mxu0
        %v2613 = vadd.f32 0.0, %v2612
        %v2614 = vpop.f32.mrf.mxu0
        %v2615 = vpop.f32.mrf.mxu0
        %v2616 = vadd.f32 0.0, %v2615
        %v2617 = vpop.f32.mrf.mxu0
        %2618 = vdwg.mxu0
        %v2619 = vadd.f32 %v2347, %v2493
        %v2620 = vadd.f32 %v2348, %v2496
        %v2621 = vadd.f32 %v2349, %v2501
        %v2622 = vadd.f32 %v2350, %v2504
        %v2623 = vadd.f32 %v2351, %v2509
        %v2624 = vadd.f32 %v2352, %v2512
        %v2625 = vadd.f32 %v2353, %v2517
        %v2626 = vadd.f32 %v2354, %v2520
        %v2627 = vadd.f32 %v2355, %v2525
        %v2628 = vadd.f32 %v2356, %v2528
        %v2629 = vadd.f32 %v2357, %v2533
        %v2630 = vadd.f32 %v2358, %v2536
        %v2631 = vadd.f32 %v2359, %v2541
        %v2632 = vadd.f32 %v2360, %v2544
        %v2633 = vadd.f32 %v2361, %v2549
        %v2634 = vadd.f32 %v2362, %v2552
        %v2635 = vadd.f32 %v2363, %v2557
        %v2636 = vadd.f32 %v2364, %v2560
        %v2637 = vadd.f32 %v2365, %v2565
        %v2638 = vadd.f32 %v2366, %v2568
        %v2639 = vadd.f32 %v2367, %v2573
        %v2640 = vadd.f32 %v2368, %v2576
        %v2641 = vadd.f32 %v2369, %v2581
        %v2642 = vadd.f32 %v2370, %v2584
        %v2643 = vadd.f32 %v2371, %v2589
        %v2644 = vadd.f32 %v2372, %v2592
        %v2645 = vadd.f32 %v2373, %v2597
        %v2646 = vadd.f32 %v2374, %v2600
        %v2647 = vadd.f32 %v2375, %v2605
        %v2648 = vadd.f32 %v2376, %v2608
        %v2649 = vadd.f32 %v2377, %v2613
        %v2650 = vadd.f32 %v2378, %v2616
        %v2653 = vrot.slane %v2120, 1
        %v2654 = vrot.slane %v2379, 1
        %v2655 = vsel %vm1002, %v2653, %v2654
        %s2657 = scalar_lea.vmem %s1, 512
        %v2658 = vld [vmem:[%s2657] sm:$0xf]
        %v2659 = vld [vmem:[%s2657 + $0x4] sm:$0xf]
        %v2660 = vld [vmem:[%s2657 + $0x8] sm:$0xf]
        %v2661 = vld [vmem:[%s2657 + $0xc] sm:$0xf]
        %v2662 = vld [vmem:[%s2657 + $0x10] sm:$0xf]
        %v2663 = vld [vmem:[%s2657 + $0x14] sm:$0xf]
        %v2664 = vld [vmem:[%s2657 + $0x18] sm:$0xf]
        %v2665 = vld [vmem:[%s2657 + $0x1c] sm:$0xf]
        %v2666 = vld [vmem:[%s2657 + $0x20] sm:$0xf]
        %v2667 = vld [vmem:[%s2657 + $0x24] sm:$0xf]
        %v2668 = vld [vmem:[%s2657 + $0x28] sm:$0xf]
        %v2669 = vld [vmem:[%s2657 + $0x2c] sm:$0xf]
        %v2670 = vld [vmem:[%s2657 + $0x30] sm:$0xf]
        %v2671 = vld [vmem:[%s2657 + $0x34] sm:$0xf]
        %v2672 = vld [vmem:[%s2657 + $0x38] sm:$0xf]
        %v2673 = vld [vmem:[%s2657 + $0x3c] sm:$0xf]
        %v2690 = vunpack.c.l.b16 %v2658
        %v2691 = vunpack.c.l.b16 %v2659
        %v2692 = vunpack.c.l.b16 %v2660
        %v2693 = vunpack.c.l.b16 %v2661
        %v2694 = vunpack.c.l.b16 %v2662
        %v2695 = vunpack.c.l.b16 %v2663
        %v2696 = vunpack.c.l.b16 %v2664
        %v2697 = vunpack.c.l.b16 %v2665
        %v2698 = vunpack.c.l.b16 %v2666
        %v2699 = vunpack.c.l.b16 %v2667
        %v2700 = vunpack.c.l.b16 %v2668
        %v2701 = vunpack.c.l.b16 %v2669
        %v2702 = vunpack.c.l.b16 %v2670
        %v2703 = vunpack.c.l.b16 %v2671
        %v2704 = vunpack.c.l.b16 %v2672
        %v2705 = vunpack.c.l.b16 %v2673
        %v2706 = vpack.c.b16 %v2691, %v2690
        %v2707 = vpack.c.b16 %v2693, %v2692
        %v2708 = vpack.c.b16 %v2695, %v2694
        %v2709 = vpack.c.b16 %v2697, %v2696
        %v2710 = vpack.c.b16 %v2699, %v2698
        %v2711 = vpack.c.b16 %v2701, %v2700
        %v2712 = vpack.c.b16 %v2703, %v2702
        %v2713 = vpack.c.b16 %v2705, %v2704
        %2722 = vmatprep.subr.bf16.mxu0 0
        %2723 = vmatpush1.bf16.msra.mxu0 %v2713
        %2724 = vmatprep.subr.bf16.mxu0 0
        %2725 = vmatpush1.bf16.msra.mxu0 %v2712
        %2726 = vmatprep.subr.bf16.mxu0 0
        %2727 = vmatpush1.bf16.msra.mxu0 %v2711
        %2728 = vmatprep.subr.bf16.mxu0 0
        %2729 = vmatpush1.bf16.msra.mxu0 %v2710
        %2730 = vmatprep.subr.bf16.mxu0 0
        %2731 = vmatpush1.bf16.msra.mxu0 %v2709
        %2732 = vmatprep.subr.bf16.mxu0 0
        %2733 = vmatpush1.bf16.msra.mxu0 %v2708
        %2734 = vmatprep.subr.bf16.mxu0 0
        %2735 = vmatpush1.bf16.msra.mxu0 %v2707
        %2736 = vmatprep.subr.bf16.mxu0 0
        %2737 = vmatpush1.bf16.msra.mxu0 %v2706
        %2738 = vmatprep.subr.bf16.mxu0 0
        %2739 = vmatpush2.bf16.msra.mxu0 0
        %2740 = vmatprep.subr.bf16.mxu0 0
        %2741 = vmatpush2.bf16.msra.mxu0 0
        %2742 = vmatprep.subr.bf16.mxu0 0
        %2743 = vmatpush2.bf16.msra.mxu0 0
        %2744 = vmatprep.subr.bf16.mxu0 0
        %2745 = vmatpush2.bf16.msra.mxu0 0
        %2746 = vmatprep.subr.bf16.mxu0 0
        %2747 = vmatpush2.bf16.msra.mxu0 0
        %2748 = vmatprep.subr.bf16.mxu0 0
        %2749 = vmatpush2.bf16.msra.mxu0 0
        %2750 = vmatprep.subr.bf16.mxu0 0
        %2751 = vmatpush2.bf16.msra.mxu0 0
        %2752 = vmatprep.subr.bf16.mxu0 0
        %2753 = vmatpush2.bf16.msra.mxu0 0
        %2754 = vmatprep.mubr.bf16.mxu0 0
        %2755 = vmatmul.mubr.bf16.gmra.mxu0 %v1011
        %v2756 = vpop.f32.mrf.mxu0
        %v2757 = vadd.f32 0.0, %v2756
        %v2758 = vpop.f32.mrf.mxu0
        %v2759 = vpop.f32.mrf.mxu0
        %v2760 = vadd.f32 0.0, %v2759
        %v2761 = vpop.f32.mrf.mxu0
        %2762 = vmatprep.mubr.bf16.mxu0 0
        %2763 = vmatmul.mubr.bf16.gmra.mxu0 %v1014
        %v2764 = vpop.f32.mrf.mxu0
        %v2765 = vadd.f32 0.0, %v2764
        %v2766 = vpop.f32.mrf.mxu0
        %v2767 = vpop.f32.mrf.mxu0
        %v2768 = vadd.f32 0.0, %v2767
        %v2769 = vpop.f32.mrf.mxu0
        %2770 = vmatprep.mubr.bf16.mxu0 0
        %2771 = vmatmul.mubr.bf16.gmra.mxu0 %v1017
        %v2772 = vpop.f32.mrf.mxu0
        %v2773 = vadd.f32 0.0, %v2772
        %v2774 = vpop.f32.mrf.mxu0
        %v2775 = vpop.f32.mrf.mxu0
        %v2776 = vadd.f32 0.0, %v2775
        %v2777 = vpop.f32.mrf.mxu0
        %2778 = vmatprep.mubr.bf16.mxu0 0
        %2779 = vmatmul.mubr.bf16.gmra.mxu0 %v1020
        %v2780 = vpop.f32.mrf.mxu0
        %v2781 = vadd.f32 0.0, %v2780
        %v2782 = vpop.f32.mrf.mxu0
        %v2783 = vpop.f32.mrf.mxu0
        %v2784 = vadd.f32 0.0, %v2783
        %v2785 = vpop.f32.mrf.mxu0
        %2786 = vmatprep.mubr.bf16.mxu0 0
        %2787 = vmatmul.mubr.bf16.gmra.mxu0 %v1023
        %v2788 = vpop.f32.mrf.mxu0
        %v2789 = vadd.f32 0.0, %v2788
        %v2790 = vpop.f32.mrf.mxu0
        %v2791 = vpop.f32.mrf.mxu0
        %v2792 = vadd.f32 0.0, %v2791
        %v2793 = vpop.f32.mrf.mxu0
        %2794 = vmatprep.mubr.bf16.mxu0 0
        %2795 = vmatmul.mubr.bf16.gmra.mxu0 %v1026
        %v2796 = vpop.f32.mrf.mxu0
        %v2797 = vadd.f32 0.0, %v2796
        %v2798 = vpop.f32.mrf.mxu0
        %v2799 = vpop.f32.mrf.mxu0
        %v2800 = vadd.f32 0.0, %v2799
        %v2801 = vpop.f32.mrf.mxu0
        %2802 = vmatprep.mubr.bf16.mxu0 0
        %2803 = vmatmul.mubr.bf16.gmra.mxu0 %v1029
        %v2804 = vpop.f32.mrf.mxu0
        %v2805 = vadd.f32 0.0, %v2804
        %v2806 = vpop.f32.mrf.mxu0
        %v2807 = vpop.f32.mrf.mxu0
        %v2808 = vadd.f32 0.0, %v2807
        %v2809 = vpop.f32.mrf.mxu0
        %2810 = vmatprep.mubr.bf16.mxu0 0
        %2811 = vmatmul.mubr.bf16.gmra.mxu0 %v1032
        %v2812 = vpop.f32.mrf.mxu0
        %v2813 = vadd.f32 0.0, %v2812
        %v2814 = vpop.f32.mrf.mxu0
        %v2815 = vpop.f32.mrf.mxu0
        %v2816 = vadd.f32 0.0, %v2815
        %v2817 = vpop.f32.mrf.mxu0
        %2818 = vmatprep.mubr.bf16.mxu0 0
        %2819 = vmatmul.mubr.bf16.gmra.mxu0 %v1035
        %v2820 = vpop.f32.mrf.mxu0
        %v2821 = vadd.f32 0.0, %v2820
        %v2822 = vpop.f32.mrf.mxu0
        %v2823 = vpop.f32.mrf.mxu0
        %v2824 = vadd.f32 0.0, %v2823
        %v2825 = vpop.f32.mrf.mxu0
        %2826 = vmatprep.mubr.bf16.mxu0 0
        %2827 = vmatmul.mubr.bf16.gmra.mxu0 %v1038
        %v2828 = vpop.f32.mrf.mxu0
        %v2829 = vadd.f32 0.0, %v2828
        %v2830 = vpop.f32.mrf.mxu0
        %v2831 = vpop.f32.mrf.mxu0
        %v2832 = vadd.f32 0.0, %v2831
        %v2833 = vpop.f32.mrf.mxu0
        %2834 = vmatprep.mubr.bf16.mxu0 0
        %2835 = vmatmul.mubr.bf16.gmra.mxu0 %v1041
        %v2836 = vpop.f32.mrf.mxu0
        %v2837 = vadd.f32 0.0, %v2836
        %v2838 = vpop.f32.mrf.mxu0
        %v2839 = vpop.f32.mrf.mxu0
        %v2840 = vadd.f32 0.0, %v2839
        %v2841 = vpop.f32.mrf.mxu0
        %2842 = vmatprep.mubr.bf16.mxu0 0
        %2843 = vmatmul.mubr.bf16.gmra.mxu0 %v1044
        %v2844 = vpop.f32.mrf.mxu0
        %v2845 = vadd.f32 0.0, %v2844
        %v2846 = vpop.f32.mrf.mxu0
        %v2847 = vpop.f32.mrf.mxu0
        %v2848 = vadd.f32 0.0, %v2847
        %v2849 = vpop.f32.mrf.mxu0
        %2850 = vmatprep.mubr.bf16.mxu0 0
        %2851 = vmatmul.mubr.bf16.gmra.mxu0 %v1047
        %v2852 = vpop.f32.mrf.mxu0
        %v2853 = vadd.f32 0.0, %v2852
        %v2854 = vpop.f32.mrf.mxu0
        %v2855 = vpop.f32.mrf.mxu0
        %v2856 = vadd.f32 0.0, %v2855
        %v2857 = vpop.f32.mrf.mxu0
        %2858 = vmatprep.mubr.bf16.mxu0 0
        %2859 = vmatmul.mubr.bf16.gmra.mxu0 %v1050
        %v2860 = vpop.f32.mrf.mxu0
        %v2861 = vadd.f32 0.0, %v2860
        %v2862 = vpop.f32.mrf.mxu0
        %v2863 = vpop.f32.mrf.mxu0
        %v2864 = vadd.f32 0.0, %v2863
        %v2865 = vpop.f32.mrf.mxu0
        %2866 = vmatprep.mubr.bf16.mxu0 0
        %2867 = vmatmul.mubr.bf16.gmra.mxu0 %v1860
        %v2868 = vpop.f32.mrf.mxu0
        %v2869 = vadd.f32 0.0, %v2868
        %v2870 = vpop.f32.mrf.mxu0
        %v2871 = vpop.f32.mrf.mxu0
        %v2872 = vadd.f32 0.0, %v2871
        %v2873 = vpop.f32.mrf.mxu0
        %2874 = vmatprep.mubr.bf16.mxu0 0
        %2875 = vmatmul.mubr.bf16.gmra.mxu0 %v2655
        %v2876 = vpop.f32.mrf.mxu0
        %v2877 = vadd.f32 0.0, %v2876
        %v2878 = vpop.f32.mrf.mxu0
        %v2879 = vpop.f32.mrf.mxu0
        %v2880 = vadd.f32 0.0, %v2879
        %v2881 = vpop.f32.mrf.mxu0
        %2882 = vdwg.mxu0
        %v2883 = vadd.f32 %v2619, %v2757
        %v2884 = vadd.f32 %v2620, %v2760
        %v2885 = vadd.f32 %v2621, %v2765
        %v2886 = vadd.f32 %v2622, %v2768
        %v2887 = vadd.f32 %v2623, %v2773
        %v2888 = vadd.f32 %v2624, %v2776
        %v2889 = vadd.f32 %v2625, %v2781
        %v2890 = vadd.f32 %v2626, %v2784
        %v2891 = vadd.f32 %v2627, %v2789
        %v2892 = vadd.f32 %v2628, %v2792
        %v2893 = vadd.f32 %v2629, %v2797
        %v2894 = vadd.f32 %v2630, %v2800
        %v2895 = vadd.f32 %v2631, %v2805
        %v2896 = vadd.f32 %v2632, %v2808
        %v2897 = vadd.f32 %v2633, %v2813
        %v2898 = vadd.f32 %v2634, %v2816
        %v2899 = vadd.f32 %v2635, %v2821
        %v2900 = vadd.f32 %v2636, %v2824
        %v2901 = vadd.f32 %v2637, %v2829
        %v2902 = vadd.f32 %v2638, %v2832
        %v2903 = vadd.f32 %v2639, %v2837
        %v2904 = vadd.f32 %v2640, %v2840
        %v2905 = vadd.f32 %v2641, %v2845
        %v2906 = vadd.f32 %v2642, %v2848
        %v2907 = vadd.f32 %v2643, %v2853
        %v2908 = vadd.f32 %v2644, %v2856
        %v2909 = vadd.f32 %v2645, %v2861
        %v2910 = vadd.f32 %v2646, %v2864
        %v2911 = vadd.f32 %v2647, %v2869
        %v2912 = vadd.f32 %v2648, %v2872
        %v2913 = vadd.f32 %v2649, %v2877
        %v2914 = vadd.f32 %v2650, %v2880
        %v2915 = vld [vmem:[%s2] sm:$0x1]
        %v2917 = vlaneseq
        %v2918 = vshrl.u32 %v2917, 7
        %v2919 = vsub.s32 0, %v2918
        %v2920 = vrot.slane %v2915, %v2919
        %v2922 = vadd.f32 %v2883, %v2920
        %v2923 = vadd.f32 %v2884, %v2920
        %v2924 = vadd.f32 %v2885, %v2920
        %v2925 = vadd.f32 %v2886, %v2920
        %v2926 = vadd.f32 %v2887, %v2920
        %v2927 = vadd.f32 %v2888, %v2920
        %v2928 = vadd.f32 %v2889, %v2920
        %v2929 = vadd.f32 %v2890, %v2920
        %v2930 = vadd.f32 %v2891, %v2920
        %v2931 = vadd.f32 %v2892, %v2920
        %v2932 = vadd.f32 %v2893, %v2920
        %v2933 = vadd.f32 %v2894, %v2920
        %v2934 = vadd.f32 %v2895, %v2920
        %v2935 = vadd.f32 %v2896, %v2920
        %v2936 = vadd.f32 %v2897, %v2920
        %v2937 = vadd.f32 %v2898, %v2920
        %v2938 = vadd.f32 %v2899, %v2920
        %v2939 = vadd.f32 %v2900, %v2920
        %v2940 = vadd.f32 %v2901, %v2920
        %v2941 = vadd.f32 %v2902, %v2920
        %v2942 = vadd.f32 %v2903, %v2920
        %v2943 = vadd.f32 %v2904, %v2920
        %v2944 = vadd.f32 %v2905, %v2920
        %v2945 = vadd.f32 %v2906, %v2920
        %v2946 = vadd.f32 %v2907, %v2920
        %v2947 = vadd.f32 %v2908, %v2920
        %v2948 = vadd.f32 %v2909, %v2920
        %v2949 = vadd.f32 %v2910, %v2920
        %v2950 = vadd.f32 %v2911, %v2920
        %v2951 = vadd.f32 %v2912, %v2920
        %v2952 = vadd.f32 %v2913, %v2920
        %v2953 = vadd.f32 %v2914, %v2920
        %v2954 = vmax.f32 %v2922, 0.0
        %v2955 = vmax.f32 %v2923, 0.0
        %v2956 = vmax.f32 %v2924, 0.0
        %v2957 = vmax.f32 %v2925, 0.0
        %v2958 = vmax.f32 %v2926, 0.0
        %v2959 = vmax.f32 %v2927, 0.0
        %v2960 = vmax.f32 %v2928, 0.0
        %v2961 = vmax.f32 %v2929, 0.0
        %v2962 = vmax.f32 %v2930, 0.0
        %v2963 = vmax.f32 %v2931, 0.0
        %v2964 = vmax.f32 %v2932, 0.0
        %v2965 = vmax.f32 %v2933, 0.0
        %v2966 = vmax.f32 %v2934, 0.0
        %v2967 = vmax.f32 %v2935, 0.0
        %v2968 = vmax.f32 %v2936, 0.0
        %v2969 = vmax.f32 %v2937, 0.0
        %v2970 = vmax.f32 %v2938, 0.0
        %v2971 = vmax.f32 %v2939, 0.0
        %v2972 = vmax.f32 %v2940, 0.0
        %v2973 = vmax.f32 %v2941, 0.0
        %v2974 = vmax.f32 %v2942, 0.0
        %v2975 = vmax.f32 %v2943, 0.0
        %v2976 = vmax.f32 %v2944, 0.0
        %v2977 = vmax.f32 %v2945, 0.0
        %v2978 = vmax.f32 %v2946, 0.0
        %v2979 = vmax.f32 %v2947, 0.0
        %v2980 = vmax.f32 %v2948, 0.0
        %v2981 = vmax.f32 %v2949, 0.0
        %v2982 = vmax.f32 %v2950, 0.0
        %v2983 = vmax.f32 %v2951, 0.0
        %v2984 = vmax.f32 %v2952, 0.0
        %v2985 = vmax.f32 %v2953, 0.0
        %v2986 = vpack.c.bf16 %v2955, %v2954
        %v2987 = vpack.c.bf16 %v2957, %v2956
        %v2988 = vpack.c.bf16 %v2959, %v2958
        %v2989 = vpack.c.bf16 %v2961, %v2960
        %v2990 = vpack.c.bf16 %v2963, %v2962
        %v2991 = vpack.c.bf16 %v2965, %v2964
        %v2992 = vpack.c.bf16 %v2967, %v2966
        %v2993 = vpack.c.bf16 %v2969, %v2968
        %v2994 = vpack.c.bf16 %v2971, %v2970
        %v2995 = vpack.c.bf16 %v2973, %v2972
        %v2996 = vpack.c.bf16 %v2975, %v2974
        %v2997 = vpack.c.bf16 %v2977, %v2976
        %v2998 = vpack.c.bf16 %v2979, %v2978
        %v2999 = vpack.c.bf16 %v2981, %v2980
        %v3000 = vpack.c.bf16 %v2983, %v2982
        %v3001 = vpack.c.bf16 %v2985, %v2984
        %v3018 = vunpack.c.l.b16 %v2986
        %v3019 = vunpack.c.h.b16 %v2986
        %v3020 = vunpack.c.l.b16 %v2987
        %v3021 = vunpack.c.h.b16 %v2987
        %v3022 = vunpack.c.l.b16 %v2988
        %v3023 = vunpack.c.h.b16 %v2988
        %v3024 = vunpack.c.l.b16 %v2989
        %v3025 = vunpack.c.h.b16 %v2989
        %v3026 = vunpack.c.l.b16 %v2990
        %v3027 = vunpack.c.h.b16 %v2990
        %v3028 = vunpack.c.l.b16 %v2991
        %v3029 = vunpack.c.h.b16 %v2991
        %v3030 = vunpack.c.l.b16 %v2992
        %v3031 = vunpack.c.h.b16 %v2992
        %v3032 = vunpack.c.l.b16 %v2993
        %v3033 = vunpack.c.h.b16 %v2993
        %v3034 = vunpack.c.l.b16 %v2994
        %v3035 = vunpack.c.h.b16 %v2994
        %v3036 = vunpack.c.l.b16 %v2995
        %v3037 = vunpack.c.h.b16 %v2995
        %v3038 = vunpack.c.l.b16 %v2996
        %v3039 = vunpack.c.h.b16 %v2996
        %v3040 = vunpack.c.l.b16 %v2997
        %v3041 = vunpack.c.h.b16 %v2997
        %v3042 = vunpack.c.l.b16 %v2998
        %v3043 = vunpack.c.h.b16 %v2998
        %v3044 = vunpack.c.l.b16 %v2999
        %v3045 = vunpack.c.h.b16 %v2999
        %v3046 = vunpack.c.l.b16 %v3000
        %v3047 = vunpack.c.h.b16 %v3000
        %v3048 = vunpack.c.l.b16 %v3001
        %v3049 = vunpack.c.h.b16 %v3001
        %v3050 = vpack.c.b16 %v3018, %v3018
        %v3051 = vpack.c.b16 %v3019, %v3019
        %v3052 = vpack.c.b16 %v3020, %v3020
        %v3053 = vpack.c.b16 %v3021, %v3021
        %v3054 = vpack.c.b16 %v3022, %v3022
        %v3055 = vpack.c.b16 %v3023, %v3023
        %v3056 = vpack.c.b16 %v3024, %v3024
        %v3057 = vpack.c.b16 %v3025, %v3025
        %v3058 = vpack.c.b16 %v3026, %v3026
        %v3059 = vpack.c.b16 %v3027, %v3027
        %v3060 = vpack.c.b16 %v3028, %v3028
        %v3061 = vpack.c.b16 %v3029, %v3029
        %v3062 = vpack.c.b16 %v3030, %v3030
        %v3063 = vpack.c.b16 %v3031, %v3031
        %v3064 = vpack.c.b16 %v3032, %v3032
        %v3065 = vpack.c.b16 %v3033, %v3033
        %v3066 = vpack.c.b16 %v3034, %v3034
        %v3067 = vpack.c.b16 %v3035, %v3035
        %v3068 = vpack.c.b16 %v3036, %v3036
        %v3069 = vpack.c.b16 %v3037, %v3037
        %v3070 = vpack.c.b16 %v3038, %v3038
        %v3071 = vpack.c.b16 %v3039, %v3039
        %v3072 = vpack.c.b16 %v3040, %v3040
        %v3073 = vpack.c.b16 %v3041, %v3041
        %v3074 = vpack.c.b16 %v3042, %v3042
        %v3075 = vpack.c.b16 %v3043, %v3043
        %v3076 = vpack.c.b16 %v3044, %v3044
        %v3077 = vpack.c.b16 %v3045, %v3045
        %v3078 = vpack.c.b16 %v3046, %v3046
        %v3079 = vpack.c.b16 %v3047, %v3047
        %v3080 = vpack.c.b16 %v3048, %v3048
        %v3081 = vpack.c.b16 %v3049, %v3049
        %3114 = vst [vmem:[%s163] sm:$0xf] %v3050
        %3115 = vst [vmem:[%s163 + $0x4] sm:$0xf] %v3051
        %3116 = vst [vmem:[%s163 + $0x8] sm:$0xf] %v3052
        %3117 = vst [vmem:[%s163 + $0xc] sm:$0xf] %v3053
        %3118 = vst [vmem:[%s163 + $0x10] sm:$0xf] %v3054
        %3119 = vst [vmem:[%s163 + $0x14] sm:$0xf] %v3055
        %3120 = vst [vmem:[%s163 + $0x18] sm:$0xf] %v3056
        %3121 = vst [vmem:[%s163 + $0x1c] sm:$0xf] %v3057
        %3122 = vst [vmem:[%s163 + $0x20] sm:$0xf] %v3058
        %3123 = vst [vmem:[%s163 + $0x24] sm:$0xf] %v3059
        %3124 = vst [vmem:[%s163 + $0x28] sm:$0xf] %v3060
        %3125 = vst [vmem:[%s163 + $0x2c] sm:$0xf] %v3061
        %3126 = vst [vmem:[%s163 + $0x30] sm:$0xf] %v3062
        %3127 = vst [vmem:[%s163 + $0x34] sm:$0xf] %v3063
        %3128 = vst [vmem:[%s163 + $0x38] sm:$0xf] %v3064
        %3129 = vst [vmem:[%s163 + $0x3c] sm:$0xf] %v3065
        %3130 = vst [vmem:[%s163 + $0x40] sm:$0xf] %v3066
        %3131 = vst [vmem:[%s163 + $0x44] sm:$0xf] %v3067
        %3132 = vst [vmem:[%s163 + $0x48] sm:$0xf] %v3068
        %3133 = vst [vmem:[%s163 + $0x4c] sm:$0xf] %v3069
        %3134 = vst [vmem:[%s163 + $0x50] sm:$0xf] %v3070
        %3135 = vst [vmem:[%s163 + $0x54] sm:$0xf] %v3071
        %3136 = vst [vmem:[%s163 + $0x58] sm:$0xf] %v3072
        %3137 = vst [vmem:[%s163 + $0x5c] sm:$0xf] %v3073
        %3138 = vst [vmem:[%s163 + $0x60] sm:$0xf] %v3074
        %3139 = vst [vmem:[%s163 + $0x64] sm:$0xf] %v3075
        %3140 = vst [vmem:[%s163 + $0x68] sm:$0xf] %v3076
        %3141 = vst [vmem:[%s163 + $0x6c] sm:$0xf] %v3077
        %3142 = vst [vmem:[%s163 + $0x70] sm:$0xf] %v3078
        %3143 = vst [vmem:[%s163 + $0x74] sm:$0xf] %v3079
        %3144 = vst [vmem:[%s163 + $0x78] sm:$0xf] %v3080
        %3145 = vst [vmem:[%s163 + $0x7c] sm:$0xf] %v3081
        %s3146 = sand.u32 %s93, 1
        %s3147 = scalar_lea.sflag [#allocation3], %s3146
        %s3148 = sand.u32 %s93, 1
        %s3149 = smul.addr %s3148, 128
        %s3150 = scalar_lea.vmem [#allocation2], %s3149
        // Predicated region
        $region33: #{tpu_custom_call.1} parent=31 // pred_check
          %p3151 = pneg %p103
        $region34: #{tpu_custom_call.1} parent=31 // pred_check_branch
          %3153 = sbr.rel (%p3151) target = $region36
        $region35: #{tpu_custom_call.1} parent=31 // pred_region
          %s3155 = ssub.s32 2048, 2048
          %3156 = vsyncadd %s3147, %s3155
          %s3157 = smul.addr %s17, 32
          %s3158 = smul.addr %s3157, 64
          %s3159 = scalar_lea.hbm %s3, %s3158
          %s3160 = sshll.u32 %s3150, 4
          %s3161 = int_to_ptr.vmem [resolvable:$true] %s3160
          %3166 = dma.vmem_to_hbm [thread:$0]  %s3161, 2048, %s3159, %s3147, 64, 64, 4
        $region36: #{tpu_custom_call.1} parent=31 // pred_fallthru
          _
      $region32: #{tpu_custom_call.1} parent=5 // pred_fallthru
        _
      %p3167 = scmp.le.s32.totalorder 2, %s12
      // Predicated region
      $region37: #{tpu_custom_call.1} parent=5 // pred_check
        %p3168 = pneg %p3167
      $region38: #{tpu_custom_call.1} parent=5 // pred_check_branch
        %3170 = sbr.rel (%p3168) target = $region40
      $region39: #{tpu_custom_call.1} parent=5 // pred_region
        %s3171 = ssub.s32 %s12, 2
        // Predicated region
        $region41: #{tpu_custom_call.1} parent=39 // pred_check
          %p3172 = pneg %p109
        $region42: #{tpu_custom_call.1} parent=39 // pred_check_branch
          %3174 = sbr.rel (%p3172) target = $region44
        $region43: #{tpu_custom_call.1} parent=39 // pred_region
          %s3175 = sand.u32 %s94, 1
          %s3176 = scalar_lea.sflag [#allocation3], %s3175
          %s3177 = sand.u32 %s94, 1
          %s3178 = smul.addr %s3177, 128
          %s3179 = scalar_lea.vmem [#allocation2], %s3178
          %3180 = dma.done %s3176, 2048
        $region44: #{tpu_custom_call.1} parent=39 // pred_fallthru
          _
      $region40: #{tpu_custom_call.1} parent=5 // pred_fallthru
        _
    $region6: #{tpu_custom_call.1} parent=1 // loop_footer
      %s16 = sadd.s32 1, %s12
    $region7: #{tpu_custom_call.1} parent=1 // loop_footer_branch
      %11 = sbr.rel target = $region3
    $region8: #{tpu_custom_call.1} parent=1 // loop_exit
      _
    %3181 = vsyncpa [#allocation3], 1
    %s3182 = scalar_lea.sflag [#allocation3], 1
    %3183 = vsyncpa %s3182, 1

</llo_original>
